<compile_context>
chip_gen: v6e
topology: v6e:2x2x1
jax: 0.10.0
libtpu: 0.0.40
codegen_flags: <defaults>
</compile_context>

<pallas_src>
import functools
import math

import jax
import jax.numpy as jnp
import numpy as np
from jax.experimental import pallas as pl
from jax.experimental.pallas import tpu as pltpu


def _round_up(x, m):
    return (x + m - 1) // m * m


# ----------------------------- Pallas kernels ------------------------------ #

def _matmul_act_kernel(x_ref, w_ref, o_ref, acc_ref, *, act):
    """o = act(x) @ w, tiled over (M, N, K); bf16 inputs, f32 accumulation."""
    @pl.when(pl.program_id(2) == 0)
    def _():
        acc_ref[...] = jnp.zeros_like(acc_ref)

    x = x_ref[...]
    if act == "leaky_relu":            # LeakyReLU(0.2); act(0)=0 so zero padding is safe
        x = jnp.where(x > 0, x, 0.2 * x)
    elif act == "relu":
        x = jnp.maximum(x, 0)
    acc_ref[...] += jnp.dot(x, w_ref[...], preferred_element_type=jnp.float32)

    @pl.when(pl.program_id(2) == pl.num_programs(2) - 1)
    def _():
        o_ref[...] = acc_ref[...].astype(o_ref.dtype)


def matmul_act(x, w, act="none", out_dtype=jnp.float32, tm=256, tn=256, tk=512):
    """Tiled Pallas matmul with a fused elementwise activation on x.

    x: [M, K], w: [K, N].  Operands are cast to bf16 for the MXU; accumulation
    is f32.  M/N/K are zero-padded to tile multiples (N to >=128 lanes)."""
    M, K = x.shape
    K2, N = w.shape
    assert K == K2
    tm = min(tm, _round_up(M, 16))
    tn = min(tn, _round_up(N, 128))
    tk = min(tk, _round_up(K, 128))
    Mp, Kp, Np = _round_up(M, tm), _round_up(K, tk), _round_up(N, tn)
    xp = jnp.pad(x.astype(jnp.bfloat16), ((0, Mp - M), (0, Kp - K)))
    wp = jnp.pad(w.astype(jnp.bfloat16), ((0, Kp - K), (0, Np - N)))
    out = pl.pallas_call(
        functools.partial(_matmul_act_kernel, act=act),
        out_shape=jax.ShapeDtypeStruct((Mp, Np), out_dtype),
        grid=(Mp // tm, Np // tn, Kp // tk),
        in_specs=[
            pl.BlockSpec((tm, tk), lambda i, j, k: (i, k)),
            pl.BlockSpec((tk, tn), lambda i, j, k: (k, j)),
        ],
        out_specs=pl.BlockSpec((tm, tn), lambda i, j, k: (i, j)),
        scratch_shapes=[pltpu.VMEM((tm, tn), jnp.float32)],
        compiler_params=pltpu.CompilerParams(
            dimension_semantics=("parallel", "parallel", "arbitrary")),
    )(xp, wp)
    return out[:M, :N]


def _phase_matmul_relu_stats_kernel(x_ref, w_ref, o_ref, s_ref, ss_ref, acc_ref):
    """Per phase: o = ReLU(x) @ w.  Also emits per-tile channel sum and
    sum-of-squares of the f32 result (BatchNorm stats fused in the epilogue)."""
    k = pl.program_id(3)

    @pl.when(k == 0)
    def _():
        acc_ref[...] = jnp.zeros_like(acc_ref)

    x = jnp.maximum(x_ref[0], 0)               # fused ReLU; ReLU(0)=0 on padding
    acc_ref[...] += jnp.dot(x, w_ref[0], preferred_element_type=jnp.float32)

    @pl.when(k == pl.num_programs(3) - 1)
    def _():
        acc = acc_ref[...]
        o_ref[0] = acc
        s_ref[...] = jnp.sum(acc, axis=0, keepdims=True)[None, None]
        ss_ref[...] = jnp.sum(acc * acc, axis=0, keepdims=True)[None, None]


def phase_matmul_relu_stats(x, w, tm=256, tn=256, tk=512):
    """x: [P, M, K] per-phase patches, w: [P, K, N] per-phase weights.

    Returns (u_padded [P, Mp, Np] f32, sum [N] f32, sumsq [N] f32).
    Padded rows/cols are zero, so they do not perturb the statistics."""
    P, M, K = x.shape
    P2, K2, N = w.shape
    assert P == P2 and K == K2
    tm = min(tm, _round_up(M, 16))
    tn = min(tn, _round_up(N, 128))
    tk = min(tk, _round_up(K, 128))
    Mp, Kp, Np = _round_up(M, tm), _round_up(K, tk), _round_up(N, tn)
    xp = jnp.pad(x.astype(jnp.bfloat16), ((0, 0), (0, Mp - M), (0, Kp - K)))
    wp = jnp.pad(w.astype(jnp.bfloat16), ((0, 0), (0, Kp - K), (0, Np - N)))
    nmi, nnj, nkk = Mp // tm, Np // tn, Kp // tk
    u, psum, psq = pl.pallas_call(
        _phase_matmul_relu_stats_kernel,
        out_shape=(
            jax.ShapeDtypeStruct((P, Mp, Np), jnp.float32),
            jax.ShapeDtypeStruct((P, nmi, 1, Np), jnp.float32),
            jax.ShapeDtypeStruct((P, nmi, 1, Np), jnp.float32),
        ),
        grid=(P, nmi, nnj, nkk),
        in_specs=[
            pl.BlockSpec((1, tm, tk), lambda p, i, j, k: (p, i, k)),
            pl.BlockSpec((1, tk, tn), lambda p, i, j, k: (p, k, j)),
        ],
        out_specs=(
            pl.BlockSpec((1, tm, tn), lambda p, i, j, k: (p, i, j)),
            pl.BlockSpec((1, 1, 1, tn), lambda p, i, j, k: (p, i, 0, j)),
            pl.BlockSpec((1, 1, 1, tn), lambda p, i, j, k: (p, i, 0, j)),
        ),
        scratch_shapes=[pltpu.VMEM((tm, tn), jnp.float32)],
        compiler_params=pltpu.CompilerParams(
            dimension_semantics=("parallel", "parallel", "parallel", "arbitrary")),
    )(xp, wp)
    tot_sum = jnp.sum(psum, axis=(0, 1, 2))[:N]
    tot_sq = jnp.sum(psq, axis=(0, 1, 2))[:N]
    return u, tot_sum, tot_sq


def _scale_shift_kernel(u_ref, s_ref, b_ref, o_ref):
    """Tiled BatchNorm application: o = u * scale + shift (per channel)."""
    o_ref[...] = u_ref[...] * s_ref[...] + b_ref[...]


def scale_shift(u, scale, shift, tr=512, tn=256):
    R, C = u.shape
    assert R % 8 == 0 and C % 128 == 0
    tr = math.gcd(R, tr)
    tn = math.gcd(C, tn)
    return pl.pallas_call(
        _scale_shift_kernel,
        out_shape=jax.ShapeDtypeStruct((R, C), jnp.float32),
        grid=(R // tr, C // tn),
        in_specs=[
            pl.BlockSpec((tr, tn), lambda i, j: (i, j)),
            pl.BlockSpec((1, tn), lambda i, j: (0, j)),
            pl.BlockSpec((1, tn), lambda i, j: (0, j)),
        ],
        out_specs=pl.BlockSpec((tr, tn), lambda i, j: (i, j)),
        compiler_params=pltpu.CompilerParams(
            dimension_semantics=("parallel", "parallel")),
    )(u, scale, shift)


# --------------------------------- Glue ------------------------------------ #

def im2col(x_nhwc, k, stride, pad):
    """Extract k x k patches (column order: kh, kw, ci) -> [N*Ho*Wo, k*k*C]."""
    # TODO(synk): generate these shifted windows inside the matmul kernel
    # (strided VMEM loads) to avoid materializing the k*k-expanded patches in HBM.
    x = jnp.pad(x_nhwc, ((0, 0), (pad, pad), (pad, pad), (0, 0)))
    N, H, W, C = x.shape
    Ho = (H - k) // stride + 1
    Wo = (W - k) // stride + 1
    cols = []
    for kh in range(k):
        for kw in range(k):
            cols.append(x[:, kh:kh + stride * Ho:stride,
                          kw:kw + stride * Wo:stride, :])
    p = jnp.stack(cols, axis=3)  # [N, Ho, Wo, k*k, C]
    return p.reshape(N * Ho * Wo, k * k * C), (N, Ho, Wo)


def phase_patches(h):
    """2x2 patches of the (spatially zero-padded) input for each output-pixel
    parity of the stride-2 transposed conv.  h: [N, H, W, C] ->
    [4, N*H*W, 4*C], phase index r*2 + c covers output pixels (2q+r, 2p+c)."""
    N, H, W, C = h.shape
    hp = jnp.pad(h, ((0, 0), (1, 1), (1, 1), (0, 0)))
    phases = []
    for r in (0, 1):
        for c in (0, 1):
            cols = [hp[:, r + dh:r + dh + H, c + dw:c + dw + W, :]
                    for dh in (0, 1) for dw in (0, 1)]
            phases.append(jnp.stack(cols, axis=3).reshape(N * H * W, 4 * C))
    return jnp.stack(phases, axis=0)


def make_params(key, input_nc, inner_nc, outer_nc, k=4):
    k1, k2 = jax.random.split(key)
    # PyTorch layouts: Conv2d weight [out, in, kh, kw]; ConvTranspose2d [in, out, kh, kw].
    w_down_t = 0.02 * jax.random.normal(k1, (inner_nc, input_nc, k, k), jnp.float32)
    w_up_t = 0.02 * jax.random.normal(k2, (inner_nc, outer_nc, k, k), jnp.float32)
    gamma = jnp.ones((outer_nc,), jnp.float32)   # BatchNorm2d default affine init
    beta = jnp.zeros((outer_nc,), jnp.float32)

    # Down conv as im2col matmul: W_mat[(kh*k+kw)*Cin+ci, co] = w_down_t[co, ci, kh, kw].
    w_down_mat = jnp.transpose(w_down_t, (2, 3, 1, 0)).reshape(k * k * input_nc, inner_nc)

    # Transposed conv, stride-phase decomposition.  Output pixel (2q+r, 2p+c) =
    #   sum_{dh,dw in {0,1}} h_pad[q+r+dh, p+c+dw, :] @ w_up_t[:, :, 3-r-2*dh, 3-c-2*dw]
    # (h_pad = h zero-padded by 1 spatially).  Row order of each phase matrix
    # is (dh, dw, ci), matching phase_patches().
    phases = []
    for r in (0, 1):
        for c in (0, 1):
            blocks = [w_up_t[:, :, 3 - r - 2 * dh, 3 - c - 2 * dw]
                      for dh in (0, 1) for dw in (0, 1)]      # each [Ci, Co]
            phases.append(jnp.concatenate(blocks, axis=0))    # [4*Ci, Co]
    w_up_phases = jnp.stack(phases, axis=0)                   # [4, 4*Ci, Co]

    return dict(w_down_t=w_down_t, w_up_t=w_up_t, w_down_mat=w_down_mat,
                w_up_phases=w_up_phases, gamma=gamma, beta=beta)


def unet_skip_block_innermost(x_nchw, params, eps=1e-5):
    """Pallas implementation of the innermost UnetSkipConnectionBlock forward."""
    x = jnp.transpose(x_nchw, (0, 2, 3, 1)).astype(jnp.float32)   # NHWC
    inner_nc = params["w_down_mat"].shape[1]
    outer_nc = params["gamma"].shape[0]

    # ---- down: LeakyReLU(0.2) + Conv2d(4,2,1) fused in one tiled bf16 matmul ----
    patches, (Nb, Ho, Wo) = im2col(x.astype(jnp.bfloat16), 4, 2, 1)
    h = matmul_act(patches, params["w_down_mat"], act="leaky_relu",
                   out_dtype=jnp.bfloat16)
    h = h.reshape(Nb, Ho, Wo, inner_nc)

    # ---- up: ReLU + ConvTranspose2d(4,2,1) via 4-phase decomposition,
    #          BatchNorm statistics fused into the matmul epilogue ----
    up_patches = phase_patches(h)                 # [4, Nb*Ho*Wo, 4*inner_nc]
    m_real = Nb * Ho * Wo
    u_pad, tot_sum, tot_sq = phase_matmul_relu_stats(up_patches, params["w_up_phases"])
    P, Mp, Np = u_pad.shape

    # ---- BatchNorm2d (training-mode batch statistics, biased variance) ----
    cnt = 4.0 * m_real                            # = Nb * (2*Ho) * (2*Wo)
    mean = tot_sum / cnt
    var = jnp.maximum(tot_sq / cnt - mean * mean, 0.0)
    scale = params["gamma"] * jax.lax.rsqrt(var + eps)
    shift = params["beta"] - mean * scale
    scale_p = jnp.pad(scale, (0, Np - outer_nc)).reshape(1, Np)
    shift_p = jnp.pad(shift, (0, Np - outer_nc)).reshape(1, Np)
    un = scale_shift(u_pad.reshape(P * Mp, Np), scale_p, shift_p)
    un = un.reshape(P, Mp, Np)[:, :m_real, :outer_nc]

    # ---- interleave the 4 parities back to the spatial layout ----
    y = un.reshape(2, 2, Nb, Ho, Wo, outer_nc)               # [r, c, n, q, p, co]
    y = jnp.transpose(y, (2, 3, 0, 4, 1, 5)).reshape(Nb, 2 * Ho, 2 * Wo, outer_nc)

    # ---- skip connection: concat([x, model(x)], channel dim) ----
    # TODO(synk): write `y` directly into the channel-offset slice of the final
    # output inside the BN-apply kernel to avoid XLA's concatenate copy.
    out = jnp.concatenate([x, y], axis=-1)
    return jnp.transpose(out, (0, 3, 1, 2))                   # back to NCHW


# ------------------------------ Reference ----------------------------------- #

def reference(x_nchw, params, eps=1e-5):
    """Pure-JAX f32 reference mirroring the PyTorch forward (numerics check)."""
    x = x_nchw.astype(jnp.float32)
    h = jnp.where(x > 0, x, 0.2 * x)
    h = jax.lax.conv_general_dilated(
        h, params["w_down_t"], window_strides=(2, 2), padding=[(1, 1), (1, 1)],
        dimension_numbers=("NCHW", "OIHW", "NCHW"),
        precision=jax.lax.Precision.HIGHEST)
    h = jnp.maximum(h, 0.0)
    w_conv = jnp.transpose(params["w_up_t"][:, :, ::-1, ::-1], (1, 0, 2, 3))
    u = jax.lax.conv_general_dilated(
        h, w_conv, window_strides=(1, 1), padding=[(2, 2), (2, 2)],
        lhs_dilation=(2, 2), dimension_numbers=("NCHW", "OIHW", "NCHW"),
        precision=jax.lax.Precision.HIGHEST)
    mean = jnp.mean(u, axis=(0, 2, 3), keepdims=True)
    var = jnp.mean(jnp.square(u - mean), axis=(0, 2, 3), keepdims=True)
    un = (u - mean) * jax.lax.rsqrt(var + eps) \
        * params["gamma"].reshape(1, -1, 1, 1) + params["beta"].reshape(1, -1, 1, 1)
    return jnp.concatenate([x, un], axis=1)


# --------------------------------- Main ------------------------------------- #

if __name__ == "__main__":
    key = jax.random.PRNGKey(0)
    kx, kp = jax.random.split(key)

    batch, input_nc, inner_nc, outer_nc, spatial = 2, 4, 8, 4, 16
    x = jax.random.normal(kx, (batch, input_nc, spatial, spatial), jnp.float32)
    params = make_params(kp, input_nc, inner_nc, outer_nc)

    fwd = jax.jit(unet_skip_block_innermost)
    out = jax.block_until_ready(fwd(x, params))
    assert out.shape == (batch, input_nc + outer_nc, spatial, spatial), out.shape

    ref = jax.block_until_ready(reference(x, params))
    # Kernel runs bf16 MXU matmuls (f32 accumulation); the reference is full
    # f32/HIGHEST, and BatchNorm rescales the result to ~unit variance, so a
    # loose tolerance is expected here (the skip-connection channels match exactly).
    np.testing.assert_allclose(np.asarray(out), np.asarray(ref), rtol=5e-2, atol=8e-2)

    print("KERNEL_OK")
</pallas_src>

<mosaic_0001>
module attributes {stable_mosaic.version = 11 : i64} {
  func.func @_matmul_act_kernel(%arg0: i32, %arg1: i32, %arg2: i32, %arg3: memref<128x128xbf16, #tpu.memory_space<vmem>>, %arg4: memref<128x128xbf16, #tpu.memory_space<vmem>>, %arg5: memref<128x128xbf16, #tpu.memory_space<vmem>>, %arg6: memref<128x128xf32, #tpu.memory_space<vmem>>) attributes {dimension_semantics = [#tpu.dimension_semantics<parallel>, #tpu.dimension_semantics<parallel>, #tpu.dimension_semantics<arbitrary>], iteration_bounds = array<i64: 1, 1, 1>, scalar_prefetch = 0 : i64, scratch_operands = 1 : i64, tpu.core_type = #tpu.core_type<tc>, window_params = [{transform_indices = @transform_0, window_bounds = array<i64: 128, 128>}, {transform_indices = @transform_1, window_bounds = array<i64: 128, 128>}, {transform_indices = @transform_2, window_bounds = array<i64: 128, 128>}]} {
    %c0_i32 = arith.constant 0 : i32
    %0 = arith.cmpi eq, %arg2, %c0_i32 : i32
    %1 = arith.extui %0 : i1 to i32
    %c0_i32_0 = arith.constant 0 : i32
    %2 = arith.cmpi ne, %1, %c0_i32_0 : i32
    scf.if %2 {
      %cst_12 = arith.constant 0.000000e+00 : f32
      %17 = vector.broadcast %cst_12 : f32 to vector<128x128xf32>
      %c0_13 = arith.constant 0 : index
      %c0_14 = arith.constant 0 : index
      %18 = vector.load %arg6[%c0_13, %c0_14] : memref<128x128xf32, #tpu.memory_space<vmem>>, vector<128x128xf32>
      tpu.vector_store %arg6[%c0_13, %c0_14], %17 {strides = array<i32>} : memref<128x128xf32, #tpu.memory_space<vmem>>, vector<128x128xf32>,
    } else {
    }
    %c0 = arith.constant 0 : index
    %c0_1 = arith.constant 0 : index
    %3 = vector.load %arg3[%c0, %c0_1] : memref<128x128xbf16, #tpu.memory_space<vmem>>, vector<128x128xbf16>
    %cst = arith.constant 0.000000e+00 : bf16
    %4 = vector.broadcast %cst : bf16 to vector<128x128xbf16>
    %5 = arith.cmpf ogt, %3, %4 : vector<128x128xbf16>
    %cst_2 = arith.constant 2.001950e-01 : bf16
    %6 = vector.broadcast %cst_2 : bf16 to vector<128x128xbf16>
    %7 = arith.mulf %6, %3 : vector<128x128xbf16>
    %8 = arith.select %5, %3, %7 : vector<128x128xi1>, vector<128x128xbf16>
    %c0_3 = arith.constant 0 : index
    %c0_4 = arith.constant 0 : index
    %9 = vector.load %arg6[%c0_3, %c0_4] : memref<128x128xf32, #tpu.memory_space<vmem>>, vector<128x128xf32>
    %c0_5 = arith.constant 0 : index
    %c0_6 = arith.constant 0 : index
    %10 = vector.load %arg4[%c0_5, %c0_6] : memref<128x128xbf16, #tpu.memory_space<vmem>>, vector<128x128xbf16>
    %cst_7 = arith.constant dense<0.000000e+00> : vector<128x128xf32>
    %11 = tpu.matmul %8, %10, %cst_7 {dimension_numbers = #tpu.dot_dimension_numbers<[1], [0], [0], [1], [0, 0, 1, 1], [], []>} : vector<128x128xbf16>, vector<128x128xbf16>, vector<128x128xf32> -> vector<128x128xf32>
    %12 = arith.addf %9, %11 : vector<128x128xf32>
    %c0_8 = arith.constant 0 : index
    %c0_9 = arith.constant 0 : index
    %13 = vector.load %arg6[%c0_8, %c0_9] : memref<128x128xf32, #tpu.memory_space<vmem>>, vector<128x128xf32>
    tpu.vector_store %arg6[%c0_8, %c0_9], %12 {strides = array<i32>} : memref<128x128xf32, #tpu.memory_space<vmem>>, vector<128x128xf32>,
    %c0_i32_10 = arith.constant 0 : i32
    %14 = arith.cmpi eq, %arg2, %c0_i32_10 : i32
    %15 = arith.extui %14 : i1 to i32
    %c0_i32_11 = arith.constant 0 : i32
    %16 = arith.cmpi ne, %15, %c0_i32_11 : i32
    scf.if %16 {
      %c0_12 = arith.constant 0 : index
      %c0_13 = arith.constant 0 : index
      %17 = vector.load %arg6[%c0_12, %c0_13] : memref<128x128xf32, #tpu.memory_space<vmem>>, vector<128x128xf32>
      %18 = arith.truncf %17 : vector<128x128xf32> to vector<128x128xbf16>
      %c0_14 = arith.constant 0 : index
      %c0_15 = arith.constant 0 : index
      %19 = vector.load %arg5[%c0_14, %c0_15] : memref<128x128xbf16, #tpu.memory_space<vmem>>, vector<128x128xbf16>
      tpu.vector_store %arg5[%c0_14, %c0_15], %18 {strides = array<i32>} : memref<128x128xbf16, #tpu.memory_space<vmem>>, vector<128x128xbf16>,
    } else {
    }
    return
  }
  func.func @transform_0(%arg0: i32, %arg1: i32, %arg2: i32) -> (i32, i32) {
    %c0_i32 = arith.constant 0 : i32
    return %arg0, %arg2 : i32, i32
  }
  func.func @transform_1(%arg0: i32, %arg1: i32, %arg2: i32) -> (i32, i32) {
    %c0_i32 = arith.constant 0 : i32
    return %arg2, %arg1 : i32, i32
  }
  func.func @transform_2(%arg0: i32, %arg1: i32, %arg2: i32) -> (i32, i32) {
    %c0_i32 = arith.constant 0 : i32
    return %arg0, %arg1 : i32, i32
  }
}

module attributes {stable_mosaic.version = 11 : i64} {
  func.func @_phase_matmul_relu_stats_kernel(%arg0: i32, %arg1: i32, %arg2: i32, %arg3: i32, %arg4: memref<1x128x128xbf16, #tpu.memory_space<vmem>>, %arg5: memref<1x128x128xbf16, #tpu.memory_space<vmem>>, %arg6: memref<1x128x128xf32, #tpu.memory_space<vmem>>, %arg7: memref<1x1x1x128xf32, #tpu.memory_space<vmem>>, %arg8: memref<1x1x1x128xf32, #tpu.memory_space<vmem>>, %arg9: memref<128x128xf32, #tpu.memory_space<vmem>>) attributes {dimension_semantics = [#tpu.dimension_semantics<parallel>, #tpu.dimension_semantics<parallel>, #tpu.dimension_semantics<parallel>, #tpu.dimension_semantics<arbitrary>], iteration_bounds = array<i64: 4, 1, 1, 1>, scalar_prefetch = 0 : i64, scratch_operands = 1 : i64, tpu.core_type = #tpu.core_type<tc>, window_params = [{transform_indices = @transform_0, window_bounds = array<i64: 1, 128, 128>}, {transform_indices = @transform_1, window_bounds = array<i64: 1, 128, 128>}, {transform_indices = @transform_2, window_bounds = array<i64: 1, 128, 128>}, {transform_indices = @transform_3, window_bounds = array<i64: 1, 1, 1, 128>}, {transform_indices = @transform_4, window_bounds = array<i64: 1, 1, 1, 128>}]} {
    %c0_i32 = arith.constant 0 : i32
    %0 = arith.cmpi eq, %arg3, %c0_i32 : i32
    %1 = arith.extui %0 : i1 to i32
    %c0_i32_0 = arith.constant 0 : i32
    %2 = arith.cmpi ne, %1, %c0_i32_0 : i32
    scf.if %2 {
      %cst_13 = arith.constant 0.000000e+00 : f32
      %16 = vector.broadcast %cst_13 : f32 to vector<128x128xf32>
      %c0_14 = arith.constant 0 : index
      %c0_15 = arith.constant 0 : index
      %17 = vector.load %arg9[%c0_14, %c0_15] : memref<128x128xf32, #tpu.memory_space<vmem>>, vector<128x128xf32>
      tpu.vector_store %arg9[%c0_14, %c0_15], %16 {strides = array<i32>} : memref<128x128xf32, #tpu.memory_space<vmem>>, vector<128x128xf32>,
    } else {
    }
    %c0 = arith.constant 0 : index
    %c0_1 = arith.constant 0 : index
    %c0_2 = arith.constant 0 : index
    %3 = vector.load %arg4[%c0, %c0_1, %c0_2] : memref<1x128x128xbf16, #tpu.memory_space<vmem>>, vector<1x128x128xbf16>
    %4 = vector.shape_cast %3 : vector<1x128x128xbf16> to vector<128x128xbf16>
    %cst = arith.constant 0.000000e+00 : bf16
    %5 = vector.broadcast %cst : bf16 to vector<128x128xbf16>
    %6 = arith.maximumf %4, %5 : vector<128x128xbf16>
    %c0_3 = arith.constant 0 : index
    %c0_4 = arith.constant 0 : index
    %7 = vector.load %arg9[%c0_3, %c0_4] : memref<128x128xf32, #tpu.memory_space<vmem>>, vector<128x128xf32>
    %c0_5 = arith.constant 0 : index
    %c0_6 = arith.constant 0 : index
    %c0_7 = arith.constant 0 : index
    %8 = vector.load %arg5[%c0_5, %c0_6, %c0_7] : memref<1x128x128xbf16, #tpu.memory_space<vmem>>, vector<1x128x128xbf16>
    %9 = vector.shape_cast %8 : vector<1x128x128xbf16> to vector<128x128xbf16>
    %cst_8 = arith.constant dense<0.000000e+00> : vector<128x128xf32>
    %10 = tpu.matmul %6, %9, %cst_8 {dimension_numbers = #tpu.dot_dimension_numbers<[1], [0], [0], [1], [0, 0, 1, 1], [], []>} : vector<128x128xbf16>, vector<128x128xbf16>, vector<128x128xf32> -> vector<128x128xf32>
    %11 = arith.addf %7, %10 : vector<128x128xf32>
    %c0_9 = arith.constant 0 : index
    %c0_10 = arith.constant 0 : index
    %12 = vector.load %arg9[%c0_9, %c0_10] : memref<128x128xf32, #tpu.memory_space<vmem>>, vector<128x128xf32>
    tpu.vector_store %arg9[%c0_9, %c0_10], %11 {strides = array<i32>} : memref<128x128xf32, #tpu.memory_space<vmem>>, vector<128x128xf32>,
    %c0_i32_11 = arith.constant 0 : i32
    %13 = arith.cmpi eq, %arg3, %c0_i32_11 : i32
    %14 = arith.extui %13 : i1 to i32
    %c0_i32_12 = arith.constant 0 : i32
    %15 = arith.cmpi ne, %14, %c0_i32_12 : i32
    scf.if %15 {
      %c0_13 = arith.constant 0 : index
      %c0_14 = arith.constant 0 : index
      %16 = vector.load %arg9[%c0_13, %c0_14] : memref<128x128xf32, #tpu.memory_space<vmem>>, vector<128x128xf32>
      %c0_15 = arith.constant 0 : index
      %c0_16 = arith.constant 0 : index
      %c0_17 = arith.constant 0 : index
      %17 = vector.load %arg6[%c0_15, %c0_16, %c0_17] : memref<1x128x128xf32, #tpu.memory_space<vmem>>, vector<1x128x128xf32>
      %18 = vector.shape_cast %17 : vector<1x128x128xf32> to vector<128x128xf32>
      %19 = vector.shape_cast %16 : vector<128x128xf32> to vector<1x128x128xf32>
      tpu.vector_store %arg6[%c0_15, %c0_16, %c0_17], %19 {strides = array<i32>} : memref<1x128x128xf32, #tpu.memory_space<vmem>>, vector<1x128x128xf32>,
      %cst_18 = arith.constant dense<0.000000e+00> : vector<128xf32>
      %20 = vector.multi_reduction <add>, %16, %cst_18 [0] : vector<128x128xf32> to vector<128xf32>
      %21 = vector.shape_cast %20 : vector<128xf32> to vector<1x128xf32>
      %22 = vector.shape_cast %21 : vector<1x128xf32> to vector<1x1x1x128xf32>
      %c0_19 = arith.constant 0 : index
      %c0_20 = arith.constant 0 : index
      %c0_21 = arith.constant 0 : index
      %c0_22 = arith.constant 0 : index
      %23 = vector.load %arg7[%c0_19, %c0_20, %c0_21, %c0_22] : memref<1x1x1x128xf32, #tpu.memory_space<vmem>>, vector<1x1x1x128xf32>
      tpu.vector_store %arg7[%c0_19, %c0_20, %c0_21, %c0_22], %22 {strides = array<i32>} : memref<1x1x1x128xf32, #tpu.memory_space<vmem>>, vector<1x1x1x128xf32>,
      %24 = arith.mulf %16, %16 : vector<128x128xf32>
      %cst_23 = arith.constant dense<0.000000e+00> : vector<128xf32>
      %25 = vector.multi_reduction <add>, %24, %cst_23 [0] : vector<128x128xf32> to vector<128xf32>
      %26 = vector.shape_cast %25 : vector<128xf32> to vector<1x128xf32>
      %27 = vector.shape_cast %26 : vector<1x128xf32> to vector<1x1x1x128xf32>
      %c0_24 = arith.constant 0 : index
      %c0_25 = arith.constant 0 : index
      %c0_26 = arith.constant 0 : index
      %c0_27 = arith.constant 0 : index
      %28 = vector.load %arg8[%c0_24, %c0_25, %c0_26, %c0_27] : memref<1x1x1x128xf32, #tpu.memory_space<vmem>>, vector<1x1x1x128xf32>
      tpu.vector_store %arg8[%c0_24, %c0_25, %c0_26, %c0_27], %27 {strides = array<i32>} : memref<1x1x1x128xf32, #tpu.memory_space<vmem>>, vector<1x1x1x128xf32>,
    } else {
    }
    return
  }
  func.func @transform_0(%arg0: i32, %arg1: i32, %arg2: i32, %arg3: i32) -> (i32, i32, i32) {
    %c0_i32 = arith.constant 0 : i32
    return %arg0, %arg1, %arg3 : i32, i32, i32
  }
  func.func @transform_1(%arg0: i32, %arg1: i32, %arg2: i32, %arg3: i32) -> (i32, i32, i32) {
    %c0_i32 = arith.constant 0 : i32
    return %arg0, %arg3, %arg2 : i32, i32, i32
  }
  func.func @transform_2(%arg0: i32, %arg1: i32, %arg2: i32, %arg3: i32) -> (i32, i32, i32) {
    %c0_i32 = arith.constant 0 : i32
    return %arg0, %arg1, %arg2 : i32, i32, i32
  }
  func.func @transform_3(%arg0: i32, %arg1: i32, %arg2: i32, %arg3: i32) -> (i32, i32, i32, i32) {
    %c0_i32 = arith.constant 0 : i32
    %c0_i32_0 = arith.constant 0 : i32
    return %arg0, %arg1, %c0_i32, %arg2 : i32, i32, i32, i32
  }
  func.func @transform_4(%arg0: i32, %arg1: i32, %arg2: i32, %arg3: i32) -> (i32, i32, i32, i32) {
    %c0_i32 = arith.constant 0 : i32
    %c0_i32_0 = arith.constant 0 : i32
    return %arg0, %arg1, %c0_i32, %arg2 : i32, i32, i32, i32
  }
}

module attributes {stable_mosaic.version = 11 : i64} {
  func.func @_scale_shift_kernel(%arg0: i32, %arg1: i32, %arg2: memref<512x128xf32, #tpu.memory_space<vmem>>, %arg3: memref<1x128xf32, #tpu.memory_space<vmem>>, %arg4: memref<1x128xf32, #tpu.memory_space<vmem>>, %arg5: memref<512x128xf32, #tpu.memory_space<vmem>>) attributes {dimension_semantics = [#tpu.dimension_semantics<parallel>, #tpu.dimension_semantics<parallel>], iteration_bounds = array<i64: 1, 1>, scalar_prefetch = 0 : i64, scratch_operands = 0 : i64, tpu.core_type = #tpu.core_type<tc>, window_params = [{transform_indices = @transform_0, window_bounds = array<i64: 512, 128>}, {transform_indices = @transform_1, window_bounds = array<i64: 1, 128>}, {transform_indices = @transform_2, window_bounds = array<i64: 1, 128>}, {transform_indices = @transform_3, window_bounds = array<i64: 512, 128>}]} {
    %c0 = arith.constant 0 : index
    %c0_0 = arith.constant 0 : index
    %0 = vector.load %arg2[%c0, %c0_0] : memref<512x128xf32, #tpu.memory_space<vmem>>, vector<512x128xf32>
    %c0_1 = arith.constant 0 : index
    %c0_2 = arith.constant 0 : index
    %1 = vector.load %arg3[%c0_1, %c0_2] : memref<1x128xf32, #tpu.memory_space<vmem>>, vector<1x128xf32>
    %2 = vector.broadcast %1 : vector<1x128xf32> to vector<512x128xf32>
    %3 = arith.mulf %0, %2 : vector<512x128xf32>
    %c0_3 = arith.constant 0 : index
    %c0_4 = arith.constant 0 : index
    %4 = vector.load %arg4[%c0_3, %c0_4] : memref<1x128xf32, #tpu.memory_space<vmem>>, vector<1x128xf32>
    %5 = vector.broadcast %4 : vector<1x128xf32> to vector<512x128xf32>
    %6 = arith.addf %3, %5 : vector<512x128xf32>
    %c0_5 = arith.constant 0 : index
    %c0_6 = arith.constant 0 : index
    %7 = vector.load %arg5[%c0_5, %c0_6] : memref<512x128xf32, #tpu.memory_space<vmem>>, vector<512x128xf32>
    tpu.vector_store %arg5[%c0_5, %c0_6], %6 {strides = array<i32>} : memref<512x128xf32, #tpu.memory_space<vmem>>, vector<512x128xf32>,
    return
  }
  func.func @transform_0(%arg0: i32, %arg1: i32) -> (i32, i32) {
    %c0_i32 = arith.constant 0 : i32
    return %arg0, %arg1 : i32, i32
  }
  func.func @transform_1(%arg0: i32, %arg1: i32) -> (i32, i32) {
    %c0_i32 = arith.constant 0 : i32
    %c0_i32_0 = arith.constant 0 : i32
    return %c0_i32, %arg1 : i32, i32
  }
  func.func @transform_2(%arg0: i32, %arg1: i32) -> (i32, i32) {
    %c0_i32 = arith.constant 0 : i32
    %c0_i32_0 = arith.constant 0 : i32
    return %c0_i32, %arg1 : i32, i32
  }
  func.func @transform_3(%arg0: i32, %arg1: i32) -> (i32, i32) {
    %c0_i32 = arith.constant 0 : i32
    return %arg0, %arg1 : i32, i32
  }
}

</mosaic_0001>

<llo_original>
// kernel: unet_skip_block_innermost.3
$region0: #{unet_skip_block_innermost.3}
  #allocation0 [shape = 'u32[]', space=smem, size = 0x4, offset = 0x4, fixed_abs, tag = 'smem constant byte address 0x4 - core index']
  #allocation1 [shape = 'u32[144,128]{1,0:T(1,128)}', space=vmem, size = 0x12000, scoped, tag = 'internal scratch']
  #allocation2 [shape = 'f32[128,128]{1,0:T(8,128)}', space=vmem, size = 0x10000, scoped, tag = 'scratch operand']
  %s0 = inlined_call_operand.vmem [shape: bf16[128,128], index: 0, kind: input, shape index: {}]
  %s1 = inlined_call_operand.vmem [shape: bf16[128,128], index: 1, kind: input, shape index: {}]
  %s2 = inlined_call_operand.vmem [shape: bf16[128,128], index: 2, kind: output, shape index: {}]
  %s3 = sld [smem:[#allocation0]]
  $region26: #{unet_skip_block_innermost.3} parent=0
    _
  %s5 = ssub.s32 1, %s3
  %s6 = scalar_select 0, %s5, %s3
  // Predicated region
  $region2: #{unet_skip_block_innermost.3} parent=0 // pred_check
    _
  $region3: #{unet_skip_block_innermost.3} parent=0 // pred_check_branch
    %8 = sbr.rel (0) target = $region5
  $region4: #{unet_skip_block_innermost.3} parent=0 // pred_region
    _
  $region5: #{unet_skip_block_innermost.3} parent=0 // pred_fallthru
    _
  // Predicated region
  $region6: #{unet_skip_block_innermost.3} parent=0 // pred_check
    _
  $region7: #{unet_skip_block_innermost.3} parent=0 // pred_check_branch
    %10 = sbr.rel (0) target = $region9
  $region8: #{unet_skip_block_innermost.3} parent=0 // pred_region
    _
  $region9: #{unet_skip_block_innermost.3} parent=0 // pred_fallthru
    _
  %p13 = scmp.eq.s32.totalorder 0, 0
  // Predicated region
  $region10: #{unet_skip_block_innermost.3} parent=0 // pred_check
    %p14 = pneg %p13
  $region11: #{unet_skip_block_innermost.3} parent=0 // pred_check_branch
    %16 = sbr.rel (%p14) target = $region13
  $region12: #{unet_skip_block_innermost.3} parent=0 // pred_region
    %17 = vst [vmem:[#allocation2] sm:$0xff] 0.0
    %18 = vst [vmem:[#allocation2 + $0x8] sm:$0xff] 0.0
    %19 = vst [vmem:[#allocation2 + $0x10] sm:$0xff] 0.0
    %20 = vst [vmem:[#allocation2 + $0x18] sm:$0xff] 0.0
    %21 = vst [vmem:[#allocation2 + $0x20] sm:$0xff] 0.0
    %22 = vst [vmem:[#allocation2 + $0x28] sm:$0xff] 0.0
    %23 = vst [vmem:[#allocation2 + $0x30] sm:$0xff] 0.0
    %24 = vst [vmem:[#allocation2 + $0x38] sm:$0xff] 0.0
    %25 = vst [vmem:[#allocation2 + $0x40] sm:$0xff] 0.0
    %26 = vst [vmem:[#allocation2 + $0x48] sm:$0xff] 0.0
    %27 = vst [vmem:[#allocation2 + $0x50] sm:$0xff] 0.0
    %28 = vst [vmem:[#allocation2 + $0x58] sm:$0xff] 0.0
    %29 = vst [vmem:[#allocation2 + $0x60] sm:$0xff] 0.0
    %30 = vst [vmem:[#allocation2 + $0x68] sm:$0xff] 0.0
    %31 = vst [vmem:[#allocation2 + $0x70] sm:$0xff] 0.0
    %32 = vst [vmem:[#allocation2 + $0x78] sm:$0xff] 0.0
  $region13: #{unet_skip_block_innermost.3} parent=0 // pred_fallthru
    _
  %v33 = vld [vmem:[%s0] sm:$0xf]
  %v34 = vld [vmem:[%s0 + $0x4] sm:$0xf]
  %v35 = vld [vmem:[%s0 + $0x8] sm:$0xf]
  %v36 = vld [vmem:[%s0 + $0xc] sm:$0xf]
  %v37 = vld [vmem:[%s0 + $0x10] sm:$0xf]
  %v38 = vld [vmem:[%s0 + $0x14] sm:$0xf]
  %v39 = vld [vmem:[%s0 + $0x18] sm:$0xf]
  %v40 = vld [vmem:[%s0 + $0x1c] sm:$0xf]
  %v41 = vld [vmem:[%s0 + $0x20] sm:$0xf]
  %v42 = vld [vmem:[%s0 + $0x24] sm:$0xf]
  %v43 = vld [vmem:[%s0 + $0x28] sm:$0xf]
  %v44 = vld [vmem:[%s0 + $0x2c] sm:$0xf]
  %v45 = vld [vmem:[%s0 + $0x30] sm:$0xf]
  %v46 = vld [vmem:[%s0 + $0x34] sm:$0xf]
  %v47 = vld [vmem:[%s0 + $0x38] sm:$0xf]
  %v48 = vld [vmem:[%s0 + $0x3c] sm:$0xf]
  %vm49 = vcmp.gt.bf16.partialorder %v33, 0
  %vm50 = vcmp.gt.bf16.partialorder %v34, 0
  %vm51 = vcmp.gt.bf16.partialorder %v35, 0
  %vm52 = vcmp.gt.bf16.partialorder %v36, 0
  %vm53 = vcmp.gt.bf16.partialorder %v37, 0
  %vm54 = vcmp.gt.bf16.partialorder %v38, 0
  %vm55 = vcmp.gt.bf16.partialorder %v39, 0
  %vm56 = vcmp.gt.bf16.partialorder %v40, 0
  %vm57 = vcmp.gt.bf16.partialorder %v41, 0
  %vm58 = vcmp.gt.bf16.partialorder %v42, 0
  %vm59 = vcmp.gt.bf16.partialorder %v43, 0
  %vm60 = vcmp.gt.bf16.partialorder %v44, 0
  %vm61 = vcmp.gt.bf16.partialorder %v45, 0
  %vm62 = vcmp.gt.bf16.partialorder %v46, 0
  %vm63 = vcmp.gt.bf16.partialorder %v47, 0
  %vm64 = vcmp.gt.bf16.partialorder %v48, 0
  %v65 = vmul.bf16 %v33, 1045249613
  %v66 = vmul.bf16 %v34, 1045249613
  %v67 = vmul.bf16 %v35, 1045249613
  %v68 = vmul.bf16 %v36, 1045249613
  %v69 = vmul.bf16 %v37, 1045249613
  %v70 = vmul.bf16 %v38, 1045249613
  %v71 = vmul.bf16 %v39, 1045249613
  %v72 = vmul.bf16 %v40, 1045249613
  %v73 = vmul.bf16 %v41, 1045249613
  %v74 = vmul.bf16 %v42, 1045249613
  %v75 = vmul.bf16 %v43, 1045249613
  %v76 = vmul.bf16 %v44, 1045249613
  %v77 = vmul.bf16 %v45, 1045249613
  %v78 = vmul.bf16 %v46, 1045249613
  %v79 = vmul.bf16 %v47, 1045249613
  %v80 = vmul.bf16 %v48, 1045249613
  %v81 = vsel %vm49, %v33, %v65
  %v82 = vsel %vm50, %v34, %v66
  %v83 = vsel %vm51, %v35, %v67
  %v84 = vsel %vm52, %v36, %v68
  %v85 = vsel %vm53, %v37, %v69
  %v86 = vsel %vm54, %v38, %v70
  %v87 = vsel %vm55, %v39, %v71
  %v88 = vsel %vm56, %v40, %v72
  %v89 = vsel %vm57, %v41, %v73
  %v90 = vsel %vm58, %v42, %v74
  %v91 = vsel %vm59, %v43, %v75
  %v92 = vsel %vm60, %v44, %v76
  %v93 = vsel %vm61, %v45, %v77
  %v94 = vsel %vm62, %v46, %v78
  %v95 = vsel %vm63, %v47, %v79
  %v96 = vsel %vm64, %v48, %v80
  %v97 = vld [vmem:[#allocation2] sm:$0xff]
  %v98 = vld [vmem:[#allocation2 + $0x8] sm:$0xff]
  %v99 = vld [vmem:[#allocation2 + $0x10] sm:$0xff]
  %v100 = vld [vmem:[#allocation2 + $0x18] sm:$0xff]
  %v101 = vld [vmem:[#allocation2 + $0x20] sm:$0xff]
  %v102 = vld [vmem:[#allocation2 + $0x28] sm:$0xff]
  %v103 = vld [vmem:[#allocation2 + $0x30] sm:$0xff]
  %v104 = vld [vmem:[#allocation2 + $0x38] sm:$0xff]
  %v105 = vld [vmem:[#allocation2 + $0x40] sm:$0xff]
  %v106 = vld [vmem:[#allocation2 + $0x48] sm:$0xff]
  %v107 = vld [vmem:[#allocation2 + $0x50] sm:$0xff]
  %v108 = vld [vmem:[#allocation2 + $0x58] sm:$0xff]
  %v109 = vld [vmem:[#allocation2 + $0x60] sm:$0xff]
  %v110 = vld [vmem:[#allocation2 + $0x68] sm:$0xff]
  %v111 = vld [vmem:[#allocation2 + $0x70] sm:$0xff]
  %v112 = vld [vmem:[#allocation2 + $0x78] sm:$0xff]
  %v113 = vld [vmem:[%s1] sm:$0xf]
  %v114 = vld [vmem:[%s1 + $0x4] sm:$0xf]
  %v115 = vld [vmem:[%s1 + $0x8] sm:$0xf]
  %v116 = vld [vmem:[%s1 + $0xc] sm:$0xf]
  %v117 = vld [vmem:[%s1 + $0x10] sm:$0xf]
  %v118 = vld [vmem:[%s1 + $0x14] sm:$0xf]
  %v119 = vld [vmem:[%s1 + $0x18] sm:$0xf]
  %v120 = vld [vmem:[%s1 + $0x1c] sm:$0xf]
  %v121 = vld [vmem:[%s1 + $0x20] sm:$0xf]
  %v122 = vld [vmem:[%s1 + $0x24] sm:$0xf]
  %v123 = vld [vmem:[%s1 + $0x28] sm:$0xf]
  %v124 = vld [vmem:[%s1 + $0x2c] sm:$0xf]
  %v125 = vld [vmem:[%s1 + $0x30] sm:$0xf]
  %v126 = vld [vmem:[%s1 + $0x34] sm:$0xf]
  %v127 = vld [vmem:[%s1 + $0x38] sm:$0xf]
  %v128 = vld [vmem:[%s1 + $0x3c] sm:$0xf]
  %v145 = vunpack.c.l.b16 %v81
  %v146 = vunpack.c.l.b16 %v82
  %v147 = vunpack.c.l.b16 %v83
  %v148 = vunpack.c.l.b16 %v84
  %v149 = vunpack.c.l.b16 %v85
  %v150 = vunpack.c.l.b16 %v86
  %v151 = vunpack.c.l.b16 %v87
  %v152 = vunpack.c.l.b16 %v88
  %v153 = vunpack.c.l.b16 %v89
  %v154 = vunpack.c.l.b16 %v90
  %v155 = vunpack.c.l.b16 %v91
  %v156 = vunpack.c.l.b16 %v92
  %v157 = vunpack.c.l.b16 %v93
  %v158 = vunpack.c.l.b16 %v94
  %v159 = vunpack.c.l.b16 %v95
  %v160 = vunpack.c.l.b16 %v96
  %v161 = vpack.c.b16 %v146, %v145
  %v162 = vpack.c.b16 %v148, %v147
  %v163 = vpack.c.b16 %v150, %v149
  %v164 = vpack.c.b16 %v152, %v151
  %v165 = vpack.c.b16 %v154, %v153
  %v166 = vpack.c.b16 %v156, %v155
  %v167 = vpack.c.b16 %v158, %v157
  %v168 = vpack.c.b16 %v160, %v159
  %v193 = vunpack.c.l.b16 %v113
  %v194 = vunpack.c.l.b16 %v114
  %v195 = vunpack.c.l.b16 %v115
  %v196 = vunpack.c.l.b16 %v116
  %v197 = vunpack.c.l.b16 %v117
  %v198 = vunpack.c.l.b16 %v118
  %v199 = vunpack.c.l.b16 %v119
  %v200 = vunpack.c.l.b16 %v120
  %v201 = vunpack.c.l.b16 %v121
  %v202 = vunpack.c.l.b16 %v122
  %v203 = vunpack.c.l.b16 %v123
  %v204 = vunpack.c.l.b16 %v124
  %v205 = vunpack.c.l.b16 %v125
  %v206 = vunpack.c.l.b16 %v126
  %v207 = vunpack.c.l.b16 %v127
  %v208 = vunpack.c.l.b16 %v128
  %v209 = vpack.c.b16 %v194, %v193
  %v210 = vpack.c.b16 %v196, %v195
  %v211 = vpack.c.b16 %v198, %v197
  %v212 = vpack.c.b16 %v200, %v199
  %v213 = vpack.c.b16 %v202, %v201
  %v214 = vpack.c.b16 %v204, %v203
  %v215 = vpack.c.b16 %v206, %v205
  %v216 = vpack.c.b16 %v208, %v207
  %225 = vmatprep.subr.bf16.mxu0 0
  %226 = vmatpush1.bf16.msra.mxu0 %v216
  %227 = vmatprep.subr.bf16.mxu0 0
  %228 = vmatpush1.bf16.msra.mxu0 %v215
  %229 = vmatprep.subr.bf16.mxu0 0
  %230 = vmatpush1.bf16.msra.mxu0 %v214
  %231 = vmatprep.subr.bf16.mxu0 0
  %232 = vmatpush1.bf16.msra.mxu0 %v213
  %233 = vmatprep.subr.bf16.mxu0 0
  %234 = vmatpush1.bf16.msra.mxu0 %v212
  %235 = vmatprep.subr.bf16.mxu0 0
  %236 = vmatpush1.bf16.msra.mxu0 %v211
  %237 = vmatprep.subr.bf16.mxu0 0
  %238 = vmatpush1.bf16.msra.mxu0 %v210
  %239 = vmatprep.subr.bf16.mxu0 0
  %240 = vmatpush1.bf16.msra.mxu0 %v209
  %241 = vmatprep.subr.bf16.mxu0 0
  %242 = vmatpush2.bf16.msra.mxu0 0
  %243 = vmatprep.subr.bf16.mxu0 0
  %244 = vmatpush2.bf16.msra.mxu0 0
  %245 = vmatprep.subr.bf16.mxu0 0
  %246 = vmatpush2.bf16.msra.mxu0 0
  %247 = vmatprep.subr.bf16.mxu0 0
  %248 = vmatpush2.bf16.msra.mxu0 0
  %249 = vmatprep.subr.bf16.mxu0 0
  %250 = vmatpush2.bf16.msra.mxu0 0
  %251 = vmatprep.subr.bf16.mxu0 0
  %252 = vmatpush2.bf16.msra.mxu0 0
  %253 = vmatprep.subr.bf16.mxu0 0
  %254 = vmatpush2.bf16.msra.mxu0 0
  %255 = vmatprep.subr.bf16.mxu0 0
  %256 = vmatpush2.bf16.msra.mxu0 0
  %257 = vmatprep.mubr.bf16.mxu0 0
  %258 = vmatmul.mubr.bf16.gmra.mxu0 %v161
  %v259 = vpop.f32.mrf.mxu0
  %v260 = vadd.f32 0.0, %v259
  %v261 = vpop.f32.mrf.mxu0
  %v262 = vpop.f32.mrf.mxu0
  %v263 = vadd.f32 0.0, %v262
  %v264 = vpop.f32.mrf.mxu0
  %265 = vmatprep.mubr.bf16.mxu0 0
  %266 = vmatmul.mubr.bf16.gmra.mxu0 %v162
  %v267 = vpop.f32.mrf.mxu0
  %v268 = vadd.f32 0.0, %v267
  %v269 = vpop.f32.mrf.mxu0
  %v270 = vpop.f32.mrf.mxu0
  %v271 = vadd.f32 0.0, %v270
  %v272 = vpop.f32.mrf.mxu0
  %273 = vmatprep.mubr.bf16.mxu0 0
  %274 = vmatmul.mubr.bf16.gmra.mxu0 %v163
  %v275 = vpop.f32.mrf.mxu0
  %v276 = vadd.f32 0.0, %v275
  %v277 = vpop.f32.mrf.mxu0
  %v278 = vpop.f32.mrf.mxu0
  %v279 = vadd.f32 0.0, %v278
  %v280 = vpop.f32.mrf.mxu0
  %281 = vmatprep.mubr.bf16.mxu0 0
  %282 = vmatmul.mubr.bf16.gmra.mxu0 %v164
  %v283 = vpop.f32.mrf.mxu0
  %v284 = vadd.f32 0.0, %v283
  %v285 = vpop.f32.mrf.mxu0
  %v286 = vpop.f32.mrf.mxu0
  %v287 = vadd.f32 0.0, %v286
  %v288 = vpop.f32.mrf.mxu0
  %289 = vmatprep.mubr.bf16.mxu0 0
  %290 = vmatmul.mubr.bf16.gmra.mxu0 %v165
  %v291 = vpop.f32.mrf.mxu0
  %v292 = vadd.f32 0.0, %v291
  %v293 = vpop.f32.mrf.mxu0
  %v294 = vpop.f32.mrf.mxu0
  %v295 = vadd.f32 0.0, %v294
  %v296 = vpop.f32.mrf.mxu0
  %297 = vmatprep.mubr.bf16.mxu0 0
  %298 = vmatmul.mubr.bf16.gmra.mxu0 %v166
  %v299 = vpop.f32.mrf.mxu0
  %v300 = vadd.f32 0.0, %v299
  %v301 = vpop.f32.mrf.mxu0
  %v302 = vpop.f32.mrf.mxu0
  %v303 = vadd.f32 0.0, %v302
  %v304 = vpop.f32.mrf.mxu0
  %305 = vmatprep.mubr.bf16.mxu0 0
  %306 = vmatmul.mubr.bf16.gmra.mxu0 %v167
  %v307 = vpop.f32.mrf.mxu0
  %v308 = vadd.f32 0.0, %v307
  %v309 = vpop.f32.mrf.mxu0
  %v310 = vpop.f32.mrf.mxu0
  %v311 = vadd.f32 0.0, %v310
  %v312 = vpop.f32.mrf.mxu0
  %313 = vmatprep.mubr.bf16.mxu0 0
  %314 = vmatmul.mubr.bf16.gmra.mxu0 %v168
  %v315 = vpop.f32.mrf.mxu0
  %v316 = vadd.f32 0.0, %v315
  %v317 = vpop.f32.mrf.mxu0
  %v318 = vpop.f32.mrf.mxu0
  %v319 = vadd.f32 0.0, %v318
  %v320 = vpop.f32.mrf.mxu0
  %321 = vdwg.mxu0
  %v322 = vadd.f32 %v97, %v260
  %v323 = vadd.f32 %v98, %v263
  %v324 = vadd.f32 %v99, %v268
  %v325 = vadd.f32 %v100, %v271
  %v326 = vadd.f32 %v101, %v276
  %v327 = vadd.f32 %v102, %v279
  %v328 = vadd.f32 %v103, %v284
  %v329 = vadd.f32 %v104, %v287
  %v330 = vadd.f32 %v105, %v292
  %v331 = vadd.f32 %v106, %v295
  %v332 = vadd.f32 %v107, %v300
  %v333 = vadd.f32 %v108, %v303
  %v334 = vadd.f32 %v109, %v308
  %v335 = vadd.f32 %v110, %v311
  %v336 = vadd.f32 %v111, %v316
  %v337 = vadd.f32 %v112, %v319
  %338 = vst [vmem:[#allocation2] sm:$0xff] %v322
  %339 = vst [vmem:[#allocation2 + $0x8] sm:$0xff] %v323
  %340 = vst [vmem:[#allocation2 + $0x10] sm:$0xff] %v324
  %341 = vst [vmem:[#allocation2 + $0x18] sm:$0xff] %v325
  %342 = vst [vmem:[#allocation2 + $0x20] sm:$0xff] %v326
  %343 = vst [vmem:[#allocation2 + $0x28] sm:$0xff] %v327
  %344 = vst [vmem:[#allocation2 + $0x30] sm:$0xff] %v328
  %345 = vst [vmem:[#allocation2 + $0x38] sm:$0xff] %v329
  %346 = vst [vmem:[#allocation2 + $0x40] sm:$0xff] %v330
  %347 = vst [vmem:[#allocation2 + $0x48] sm:$0xff] %v331
  %348 = vst [vmem:[#allocation2 + $0x50] sm:$0xff] %v332
  %349 = vst [vmem:[#allocation2 + $0x58] sm:$0xff] %v333
  %350 = vst [vmem:[#allocation2 + $0x60] sm:$0xff] %v334
  %351 = vst [vmem:[#allocation2 + $0x68] sm:$0xff] %v335
  %352 = vst [vmem:[#allocation2 + $0x70] sm:$0xff] %v336
  %353 = vst [vmem:[#allocation2 + $0x78] sm:$0xff] %v337
  // Predicated region
  $region14: #{unet_skip_block_innermost.3} parent=0 // pred_check
    %p354 = pneg %p13
  $region15: #{unet_skip_block_innermost.3} parent=0 // pred_check_branch
    %356 = sbr.rel (%p354) target = $region17
  $region16: #{unet_skip_block_innermost.3} parent=0 // pred_region
    %v357 = vld [vmem:[#allocation2] sm:$0xff]
    %v358 = vld [vmem:[#allocation2 + $0x8] sm:$0xff]
    %v359 = vld [vmem:[#allocation2 + $0x10] sm:$0xff]
    %v360 = vld [vmem:[#allocation2 + $0x18] sm:$0xff]
    %v361 = vld [vmem:[#allocation2 + $0x20] sm:$0xff]
    %v362 = vld [vmem:[#allocation2 + $0x28] sm:$0xff]
    %v363 = vld [vmem:[#allocation2 + $0x30] sm:$0xff]
    %v364 = vld [vmem:[#allocation2 + $0x38] sm:$0xff]
    %v365 = vld [vmem:[#allocation2 + $0x40] sm:$0xff]
    %v366 = vld [vmem:[#allocation2 + $0x48] sm:$0xff]
    %v367 = vld [vmem:[#allocation2 + $0x50] sm:$0xff]
    %v368 = vld [vmem:[#allocation2 + $0x58] sm:$0xff]
    %v369 = vld [vmem:[#allocation2 + $0x60] sm:$0xff]
    %v370 = vld [vmem:[#allocation2 + $0x68] sm:$0xff]
    %v371 = vld [vmem:[#allocation2 + $0x70] sm:$0xff]
    %v372 = vld [vmem:[#allocation2 + $0x78] sm:$0xff]
    %v373 = vpack.c.bf16 %v358, %v357
    %v374 = vpack.c.bf16 %v360, %v359
    %v375 = vpack.c.bf16 %v362, %v361
    %v376 = vpack.c.bf16 %v364, %v363
    %v377 = vpack.c.bf16 %v366, %v365
    %v378 = vpack.c.bf16 %v368, %v367
    %v379 = vpack.c.bf16 %v370, %v369
    %v380 = vpack.c.bf16 %v372, %v371
    %v389 = vunpack.c.l.b16 %v373
    %v390 = vunpack.c.h.b16 %v373
    %v391 = vunpack.c.l.b16 %v374
    %v392 = vunpack.c.h.b16 %v374
    %v393 = vunpack.c.l.b16 %v375
    %v394 = vunpack.c.h.b16 %v375
    %v395 = vunpack.c.l.b16 %v376
    %v396 = vunpack.c.h.b16 %v376
    %v397 = vunpack.c.l.b16 %v377
    %v398 = vunpack.c.h.b16 %v377
    %v399 = vunpack.c.l.b16 %v378
    %v400 = vunpack.c.h.b16 %v378
    %v401 = vunpack.c.l.b16 %v379
    %v402 = vunpack.c.h.b16 %v379
    %v403 = vunpack.c.l.b16 %v380
    %v404 = vunpack.c.h.b16 %v380
    %v405 = vpack.c.b16 %v389, %v389
    %v406 = vpack.c.b16 %v390, %v390
    %v407 = vpack.c.b16 %v391, %v391
    %v408 = vpack.c.b16 %v392, %v392
    %v409 = vpack.c.b16 %v393, %v393
    %v410 = vpack.c.b16 %v394, %v394
    %v411 = vpack.c.b16 %v395, %v395
    %v412 = vpack.c.b16 %v396, %v396
    %v413 = vpack.c.b16 %v397, %v397
    %v414 = vpack.c.b16 %v398, %v398
    %v415 = vpack.c.b16 %v399, %v399
    %v416 = vpack.c.b16 %v400, %v400
    %v417 = vpack.c.b16 %v401, %v401
    %v418 = vpack.c.b16 %v402, %v402
    %v419 = vpack.c.b16 %v403, %v403
    %v420 = vpack.c.b16 %v404, %v404
    %437 = vst [vmem:[%s2] sm:$0xf] %v405
    %438 = vst [vmem:[%s2 + $0x4] sm:$0xf] %v406
    %439 = vst [vmem:[%s2 + $0x8] sm:$0xf] %v407
    %440 = vst [vmem:[%s2 + $0xc] sm:$0xf] %v408
    %441 = vst [vmem:[%s2 + $0x10] sm:$0xf] %v409
    %442 = vst [vmem:[%s2 + $0x14] sm:$0xf] %v410
    %443 = vst [vmem:[%s2 + $0x18] sm:$0xf] %v411
    %444 = vst [vmem:[%s2 + $0x1c] sm:$0xf] %v412
    %445 = vst [vmem:[%s2 + $0x20] sm:$0xf] %v413
    %446 = vst [vmem:[%s2 + $0x24] sm:$0xf] %v414
    %447 = vst [vmem:[%s2 + $0x28] sm:$0xf] %v415
    %448 = vst [vmem:[%s2 + $0x2c] sm:$0xf] %v416
    %449 = vst [vmem:[%s2 + $0x30] sm:$0xf] %v417
    %450 = vst [vmem:[%s2 + $0x34] sm:$0xf] %v418
    %451 = vst [vmem:[%s2 + $0x38] sm:$0xf] %v419
    %452 = vst [vmem:[%s2 + $0x3c] sm:$0xf] %v420
  $region17: #{unet_skip_block_innermost.3} parent=0 // pred_fallthru
    _
  // Predicated region
  $region18: #{unet_skip_block_innermost.3} parent=0 // pred_check
    _
  $region19: #{unet_skip_block_innermost.3} parent=0 // pred_check_branch
    %454 = sbr.rel (0) target = $region21
  $region20: #{unet_skip_block_innermost.3} parent=0 // pred_region
    _
  $region21: #{unet_skip_block_innermost.3} parent=0 // pred_fallthru
    _
  // Predicated region
  $region22: #{unet_skip_block_innermost.3} parent=0 // pred_check
    _
  $region23: #{unet_skip_block_innermost.3} parent=0 // pred_check_branch
    %456 = sbr.rel (0) target = $region25
  $region24: #{unet_skip_block_innermost.3} parent=0 // pred_region
    _
  $region25: #{unet_skip_block_innermost.3} parent=0 // pred_fallthru
    _

// kernel: unet_skip_block_innermost.4
$region0: #{unet_skip_block_innermost.4}
  #allocation0 [shape = 'u32[]', space=smem, size = 0x4, offset = 0x4, fixed_abs, tag = 'smem constant byte address 0x4 - core index']
  #allocation1 [shape = 'u32[144,128]{1,0:T(1,128)}', space=vmem, size = 0x12000, scoped, tag = 'internal scratch']
  #allocation2 [shape = 'f32[128,128]{1,0:T(8,128)}', space=vmem, size = 0x10000, scoped, tag = 'scratch operand']
  %s0 = inlined_call_operand.vmem [shape: bf16[4,128,128], index: 0, kind: input, shape index: {}]
  %s1 = inlined_call_operand.vmem [shape: bf16[4,128,128], index: 1, kind: input, shape index: {}]
  %s2 = inlined_call_operand.vmem [shape: f32[4,128,128], index: 2, kind: output, shape index: {0}]
  %s3 = inlined_call_operand.vmem [shape: f32[4,1,1,128], index: 3, kind: output, shape index: {1}]
  %s4 = inlined_call_operand.vmem [shape: f32[4,1,1,128], index: 4, kind: output, shape index: {2}]
  %5 = xla_tuple %s2, %s3, %s4
  %s6 = sld [smem:[#allocation0]]
  $region65: #{unet_skip_block_innermost.4} parent=0
    _
  %s8 = ssub.s32 1, %s6
  %s9 = scalar_select 0, %s8, %s6
  loop: start=0, step=1, limit=6
  $region2: #{unet_skip_block_innermost.4} parent=0 // loop_pre_header
    _
  $region3: #{unet_skip_block_innermost.4} parent=0 // loop_header
    %s11 = sphi 0, %s15
    %p12 = scmp.ge.s32.totalorder %s11, 6
    %s18 = sphi 0, %s44
    %s19 = sphi 0, %s40
    %s20 = sphi 0, %s36
    %s21 = sphi 0, %s32
    %s22 = sphi 0, %s18
    %s23 = sphi 0, %s19
    %s24 = sphi 0, %s20
    %s25 = sphi 0, %s21
    %s26 = sphi 0, %s22
    %s27 = sphi 0, %s23
    %s28 = sphi 0, %s24
    %s29 = sphi 0, %s25
    %s51 = sphi 0, %s53
    %s54 = sphi 0, %s51
    %s55 = sphi 0, %s54
    %s71 = sphi 0, %s55
    %s81 = sphi 0, %s83
    %s84 = sphi 0, %s81
    %s85 = sphi 0, %s84
    %s101 = sphi 0, %s85
    %s111 = sphi 0, %s113
    %s114 = sphi 0, %s111
    %s115 = sphi 0, %s114
    %s131 = sphi 0, %s115
    %s141 = sphi 0, %s143
    %s144 = sphi 0, %s141
    %s145 = sphi 0, %s144
    %s161 = sphi 0, %s145
    %s171 = sphi 0, %s173
    %s174 = sphi 0, %s171
    %s175 = sphi 0, %s174
    %s191 = sphi 0, %s175
  $region4: #{unet_skip_block_innermost.4} parent=0 // loop_header_branch
    %14 = sbr.rel (%p12) target = $region8
  $region5: #{unet_skip_block_innermost.4} parent=0 // loop_body
    %s16 = ssub.s32 %s11, 1
    %s17 = ssub.s32 %s11, 2
    %s30 = sadd.s32 1, %s21
    %p31 = scmp.ge.s32.totalorder %s30, 1
    %s32 = scalar_select %p31, 0, %s30
    %s33 = sadd.s32 1, %s20
    %s34 = scalar_select %p31, %s33, %s20
    %p35 = scmp.ge.s32.totalorder %s34, 1
    %s36 = scalar_select %p35, 0, %s34
    %s37 = sadd.s32 1, %s19
    %s38 = scalar_select %p35, %s37, %s19
    %p39 = scmp.ge.s32.totalorder %s38, 1
    %s40 = scalar_select %p39, 0, %s38
    %s41 = sadd.s32 1, %s18
    %s42 = scalar_select %p39, %s41, %s18
    %p43 = scmp.ge.s32.totalorder %s42, 4
    %s44 = scalar_select %p43, 0, %s42
    %s45 = ssub.s32 %s18, %s44
    %s46 = ssub.s32 %s19, %s40
    %s47 = sor.u32 %s45, %s46
    %s48 = ssub.s32 %s21, %s32
    %s49 = sor.u32 %s47, %s48
    %p50 = scmp.eq.s32.totalorder %s49, 0
    %s52 = sadd.s32 %s51, 1
    %s53 = scalar_select %p50, %s51, %s52
    %p56 = pneg %p50
    %p57 = scmp.eq.s32.totalorder %s11, 3
    %p58 = por %p56, %p57
    %p59 = scmp.ne.s32.totalorder %s51, %s54
    %p60 = scmp.eq.s32.totalorder %s11, 0
    %p61 = por %p59, %p60
    %p62 = scmp.ne.s32.totalorder %s51, %s54
    %p63 = scmp.eq.s32.totalorder %s16, 3
    %p64 = por %p62, %p63
    %p65 = scmp.ne.s32.totalorder %s54, %s55
    %p66 = scmp.eq.s32.totalorder %s16, 0
    %p67 = por %p65, %p66
    %p68 = scmp.ne.s32.totalorder %s54, %s55
    %p69 = scmp.eq.s32.totalorder %s17, 3
    %p70 = por %p68, %p69
    %p72 = scmp.ne.s32.totalorder %s55, %s71
    %p73 = scmp.eq.s32.totalorder %s17, 0
    %p74 = por %p72, %p73
    %s75 = ssub.s32 %s18, %s44
    %s76 = ssub.s32 %s21, %s32
    %s77 = sor.u32 %s75, %s76
    %s78 = ssub.s32 %s20, %s36
    %s79 = sor.u32 %s77, %s78
    %p80 = scmp.eq.s32.totalorder %s79, 0
    %s82 = sadd.s32 %s81, 1
    %s83 = scalar_select %p80, %s81, %s82
    %p86 = pneg %p80
    %p87 = scmp.eq.s32.totalorder %s11, 3
    %p88 = por %p86, %p87
    %p89 = scmp.ne.s32.totalorder %s81, %s84
    %p90 = scmp.eq.s32.totalorder %s11, 0
    %p91 = por %p89, %p90
    %p92 = scmp.ne.s32.totalorder %s81, %s84
    %p93 = scmp.eq.s32.totalorder %s16, 3
    %p94 = por %p92, %p93
    %p95 = scmp.ne.s32.totalorder %s84, %s85
    %p96 = scmp.eq.s32.totalorder %s16, 0
    %p97 = por %p95, %p96
    %p98 = scmp.ne.s32.totalorder %s84, %s85
    %p99 = scmp.eq.s32.totalorder %s17, 3
    %p100 = por %p98, %p99
    %p102 = scmp.ne.s32.totalorder %s85, %s101
    %p103 = scmp.eq.s32.totalorder %s17, 0
    %p104 = por %p102, %p103
    %s105 = ssub.s32 %s18, %s44
    %s106 = ssub.s32 %s19, %s40
    %s107 = sor.u32 %s105, %s106
    %s108 = ssub.s32 %s20, %s36
    %s109 = sor.u32 %s107, %s108
    %p110 = scmp.eq.s32.totalorder %s109, 0
    %s112 = sadd.s32 %s111, 1
    %s113 = scalar_select %p110, %s111, %s112
    %p116 = pneg %p110
    %p117 = scmp.eq.s32.totalorder %s11, 3
    %p118 = por %p116, %p117
    %p119 = scmp.ne.s32.totalorder %s111, %s114
    %p120 = scmp.eq.s32.totalorder %s11, 0
    %p121 = por %p119, %p120
    %p122 = scmp.ne.s32.totalorder %s111, %s114
    %p123 = scmp.eq.s32.totalorder %s16, 3
    %p124 = por %p122, %p123
    %p125 = scmp.ne.s32.totalorder %s114, %s115
    %p126 = scmp.eq.s32.totalorder %s16, 0
    %p127 = por %p125, %p126
    %p128 = scmp.ne.s32.totalorder %s114, %s115
    %p129 = scmp.eq.s32.totalorder %s17, 3
    %p130 = por %p128, %p129
    %p132 = scmp.ne.s32.totalorder %s115, %s131
    %p133 = scmp.eq.s32.totalorder %s17, 0
    %p134 = por %p132, %p133
    %s135 = ssub.s32 %s18, %s44
    %s136 = ssub.s32 %s19, %s40
    %s137 = sor.u32 %s135, %s136
    %s138 = ssub.s32 %s20, %s36
    %s139 = sor.u32 %s137, %s138
    %p140 = scmp.eq.s32.totalorder %s139, 0
    %s142 = sadd.s32 %s141, 1
    %s143 = scalar_select %p140, %s141, %s142
    %p146 = pneg %p140
    %p147 = scmp.eq.s32.totalorder %s11, 3
    %p148 = por %p146, %p147
    %p149 = scmp.ne.s32.totalorder %s141, %s144
    %p150 = scmp.eq.s32.totalorder %s11, 0
    %p151 = por %p149, %p150
    %p152 = scmp.ne.s32.totalorder %s141, %s144
    %p153 = scmp.eq.s32.totalorder %s16, 3
    %p154 = por %p152, %p153
    %p155 = scmp.ne.s32.totalorder %s144, %s145
    %p156 = scmp.eq.s32.totalorder %s16, 0
    %p157 = por %p155, %p156
    %p158 = scmp.ne.s32.totalorder %s144, %s145
    %p159 = scmp.eq.s32.totalorder %s17, 3
    %p160 = por %p158, %p159
    %p162 = scmp.ne.s32.totalorder %s145, %s161
    %p163 = scmp.eq.s32.totalorder %s17, 0
    %p164 = por %p162, %p163
    %s165 = ssub.s32 %s18, %s44
    %s166 = ssub.s32 %s19, %s40
    %s167 = sor.u32 %s165, %s166
    %s168 = ssub.s32 %s20, %s36
    %s169 = sor.u32 %s167, %s168
    %p170 = scmp.eq.s32.totalorder %s169, 0
    %s172 = sadd.s32 %s171, 1
    %s173 = scalar_select %p170, %s171, %s172
    %p176 = pneg %p170
    %p177 = scmp.eq.s32.totalorder %s11, 3
    %p178 = por %p176, %p177
    %p179 = scmp.ne.s32.totalorder %s171, %s174
    %p180 = scmp.eq.s32.totalorder %s11, 0
    %p181 = por %p179, %p180
    %p182 = scmp.ne.s32.totalorder %s171, %s174
    %p183 = scmp.eq.s32.totalorder %s16, 3
    %p184 = por %p182, %p183
    %p185 = scmp.ne.s32.totalorder %s174, %s175
    %p186 = scmp.eq.s32.totalorder %s16, 0
    %p187 = por %p185, %p186
    %p188 = scmp.ne.s32.totalorder %s174, %s175
    %p189 = scmp.eq.s32.totalorder %s17, 3
    %p190 = por %p188, %p189
    %p192 = scmp.ne.s32.totalorder %s175, %s191
    %p193 = scmp.eq.s32.totalorder %s17, 0
    %p194 = por %p192, %p193
    %p195 = scmp.le.s32.totalorder 1, %s11
    %p196 = scmp.lt.s32.totalorder %s11, 5
    %p197 = pnand %p195, %p196
    %p198 = pneg %p197
    // Predicated region
    $region9: #{unet_skip_block_innermost.4} parent=5 // pred_check
      _
    $region10: #{unet_skip_block_innermost.4} parent=5 // pred_check_branch
      %200 = sbr.rel (%p197) target = $region12
    $region11: #{unet_skip_block_innermost.4} parent=5 // pred_region
      %s201 = ssub.s32 %s11, 1
    $region12: #{unet_skip_block_innermost.4} parent=5 // pred_fallthru
      _
    %p202 = scmp.lt.s32.totalorder %s11, 4
    // Predicated region
    $region13: #{unet_skip_block_innermost.4} parent=5 // pred_check
      %p203 = pneg %p202
    $region14: #{unet_skip_block_innermost.4} parent=5 // pred_check_branch
      %205 = sbr.rel (%p203) target = $region16
    $region15: #{unet_skip_block_innermost.4} parent=5 // pred_region
      // Predicated region
      $region17: #{unet_skip_block_innermost.4} parent=15 // pred_check
        %p206 = pneg %p61
      $region18: #{unet_skip_block_innermost.4} parent=15 // pred_check_branch
        %208 = sbr.rel (%p206) target = $region20
      $region19: #{unet_skip_block_innermost.4} parent=15 // pred_region
        %s209 = smul.u32 16, %s19
        %p210 = scmp.lt.s32.totalorder %s18, 3
        %s211 = scalar_select %p210, %s18, 3
        %p212 = scmp.lt.s32.totalorder %s209, 15
        %s213 = scalar_select %p212, %s209, 15
        %p214 = scmp.lt.s32.totalorder %s21, 0
        %s215 = scalar_select %p214, %s21, 0
        %s216 = sadd.s32 %s215, %s213
        %s217 = smul.addr %s211, 16
        %s218 = sadd.s32 %s216, %s217
        %s219 = smul.addr %s218, 4
        %s220 = scalar_lea.vmem %s0, %s219
        %s221 = smul.u32 16, %s19
      $region20: #{unet_skip_block_innermost.4} parent=15 // pred_fallthru
        _
      // Predicated region
      $region21: #{unet_skip_block_innermost.4} parent=15 // pred_check
        %p222 = pneg %p91
      $region22: #{unet_skip_block_innermost.4} parent=15 // pred_check_branch
        %224 = sbr.rel (%p222) target = $region24
      $region23: #{unet_skip_block_innermost.4} parent=15 // pred_region
        %s225 = smul.u32 16, %s21
        %p226 = scmp.lt.s32.totalorder %s18, 3
        %s227 = scalar_select %p226, %s18, 3
        %p228 = scmp.lt.s32.totalorder %s225, 15
        %s229 = scalar_select %p228, %s225, 15
        %p230 = scmp.lt.s32.totalorder %s20, 0
        %s231 = scalar_select %p230, %s20, 0
        %s232 = sadd.s32 %s231, %s229
        %s233 = smul.addr %s227, 16
        %s234 = sadd.s32 %s232, %s233
        %s235 = smul.addr %s234, 4
        %s236 = scalar_lea.vmem %s1, %s235
        %s237 = smul.u32 16, %s21
      $region24: #{unet_skip_block_innermost.4} parent=15 // pred_fallthru
        _
    $region16: #{unet_skip_block_innermost.4} parent=5 // pred_fallthru
      _
    %p238 = scmp.le.s32.totalorder 1, %s11
    %p239 = scmp.lt.s32.totalorder %s11, 5
    %p240 = pnand %p238, %p239
    %p241 = pneg %p240
    // Predicated region
    $region25: #{unet_skip_block_innermost.4} parent=5 // pred_check
      _
    $region26: #{unet_skip_block_innermost.4} parent=5 // pred_check_branch
      %243 = sbr.rel (%p240) target = $region28
    $region27: #{unet_skip_block_innermost.4} parent=5 // pred_region
      %s244 = ssub.s32 %s11, 1
      %s245 = smul.u32 16, %s23
      %p246 = scmp.lt.s32.totalorder %s22, 3
      %s247 = scalar_select %p246, %s22, 3
      %p248 = scmp.lt.s32.totalorder %s245, 15
      %s249 = scalar_select %p248, %s245, 15
      %p250 = scmp.lt.s32.totalorder %s25, 0
      %s251 = scalar_select %p250, %s25, 0
      %s252 = sadd.s32 %s251, %s249
      %s253 = smul.addr %s247, 16
      %s254 = sadd.s32 %s252, %s253
      %s255 = smul.addr %s254, 4
      %s256 = scalar_lea.vmem %s0, %s255
      %p257 = pneg %p67
      %p258 = pneg %p64
      %s259 = smul.u32 16, %s25
      %p260 = scmp.lt.s32.totalorder %s22, 3
      %s261 = scalar_select %p260, %s22, 3
      %p262 = scmp.lt.s32.totalorder %s259, 15
      %s263 = scalar_select %p262, %s259, 15
      %p264 = scmp.lt.s32.totalorder %s24, 0
      %s265 = scalar_select %p264, %s24, 0
      %s266 = sadd.s32 %s265, %s263
      %s267 = smul.addr %s261, 16
      %s268 = sadd.s32 %s266, %s267
      %s269 = smul.addr %s268, 4
      %s270 = scalar_lea.vmem %s1, %s269
      %p271 = pneg %p97
      %p272 = pneg %p94
      %p273 = pneg %p127
      %p274 = pneg %p124
      %s275 = smul.u32 16, %s23
      %p276 = scmp.lt.s32.totalorder %s22, 3
      %s277 = scalar_select %p276, %s22, 3
      %p278 = scmp.lt.s32.totalorder %s275, 15
      %s279 = scalar_select %p278, %s275, 15
      %p280 = scmp.lt.s32.totalorder %s24, 0
      %s281 = scalar_select %p280, %s24, 0
      %s282 = sadd.s32 %s281, %s279
      %s283 = smul.addr %s277, 16
      %s284 = sadd.s32 %s282, %s283
      %s285 = smul.addr %s284, 8
      %s286 = scalar_lea.vmem %s2, %s285
      %p287 = pneg %p157
      %p288 = pneg %p154
      %p289 = scmp.lt.s32.totalorder %s22, 3
      %s290 = scalar_select %p289, %s22, 3
      %p291 = scmp.lt.s32.totalorder %s23, 0
      %s292 = scalar_select %p291, %s23, 0
      %p293 = scmp.lt.s32.totalorder %s24, 0
      %s294 = scalar_select %p293, %s24, 0
      %s295 = sadd.s32 %s294, %s292
      %s296 = sadd.s32 %s295, %s290
      %s297 = scalar_lea.vmem %s3, %s296
      %p298 = pneg %p187
      %p299 = pneg %p184
      %p300 = scmp.lt.s32.totalorder %s22, 3
      %s301 = scalar_select %p300, %s22, 3
      %p302 = scmp.lt.s32.totalorder %s23, 0
      %s303 = scalar_select %p302, %s23, 0
      %p304 = scmp.lt.s32.totalorder %s24, 0
      %s305 = scalar_select %p304, %s24, 0
      %s306 = sadd.s32 %s305, %s303
      %s307 = sadd.s32 %s306, %s301
      %s308 = scalar_lea.vmem %s4, %s307
      %s309 = smul.u32 16, %s23
      %p310 = scmp.lt.s32.totalorder %s22, 3
      %s311 = scalar_select %p310, %s22, 3
      %p312 = scmp.lt.s32.totalorder %s309, 15
      %s313 = scalar_select %p312, %s309, 15
      %p314 = scmp.lt.s32.totalorder %s25, 0
      %s315 = scalar_select %p314, %s25, 0
      %s316 = sadd.s32 %s315, %s313
      %s317 = smul.addr %s311, 16
      %s318 = sadd.s32 %s316, %s317
      %s319 = smul.addr %s318, 4
      %s320 = scalar_lea.vmem %s0, %s319
      %s321 = smul.u32 16, %s23
      %s322 = smul.u32 16, %s25
      %p323 = scmp.lt.s32.totalorder %s22, 3
      %s324 = scalar_select %p323, %s22, 3
      %p325 = scmp.lt.s32.totalorder %s322, 15
      %s326 = scalar_select %p325, %s322, 15
      %p327 = scmp.lt.s32.totalorder %s24, 0
      %s328 = scalar_select %p327, %s24, 0
      %s329 = sadd.s32 %s328, %s326
      %s330 = smul.addr %s324, 16
      %s331 = sadd.s32 %s329, %s330
      %s332 = smul.addr %s331, 4
      %s333 = scalar_lea.vmem %s1, %s332
      %s334 = smul.u32 16, %s25
      %s335 = smul.u32 16, %s23
      %p336 = scmp.lt.s32.totalorder %s22, 3
      %s337 = scalar_select %p336, %s22, 3
      %p338 = scmp.lt.s32.totalorder %s335, 15
      %s339 = scalar_select %p338, %s335, 15
      %p340 = scmp.lt.s32.totalorder %s24, 0
      %s341 = scalar_select %p340, %s24, 0
      %s342 = sadd.s32 %s341, %s339
      %s343 = smul.addr %s337, 16
      %s344 = sadd.s32 %s342, %s343
      %s345 = smul.addr %s344, 8
      %s346 = scalar_lea.vmem %s2, %s345
      %s347 = smul.u32 16, %s23
      %p348 = scmp.lt.s32.totalorder %s22, 3
      %s349 = scalar_select %p348, %s22, 3
      %p350 = scmp.lt.s32.totalorder %s23, 0
      %s351 = scalar_select %p350, %s23, 0
      %p352 = scmp.lt.s32.totalorder %s24, 0
      %s353 = scalar_select %p352, %s24, 0
      %s354 = sadd.s32 %s353, %s351
      %s355 = sadd.s32 %s354, %s349
      %s356 = scalar_lea.vmem %s3, %s355
      %p357 = scmp.lt.s32.totalorder %s22, 3
      %s358 = scalar_select %p357, %s22, 3
      %p359 = scmp.lt.s32.totalorder %s23, 0
      %s360 = scalar_select %p359, %s23, 0
      %p361 = scmp.lt.s32.totalorder %s24, 0
      %s362 = scalar_select %p361, %s24, 0
      %s363 = sadd.s32 %s362, %s360
      %s364 = sadd.s32 %s363, %s358
      %s365 = scalar_lea.vmem %s4, %s364
      %p367 = scmp.eq.s32.totalorder %s25, 0
      // Predicated region
      $region29: #{unet_skip_block_innermost.4} parent=27 // pred_check
        %p368 = pneg %p367
      $region30: #{unet_skip_block_innermost.4} parent=27 // pred_check_branch
        %370 = sbr.rel (%p368) target = $region32
      $region31: #{unet_skip_block_innermost.4} parent=27 // pred_region
        %371 = vst [vmem:[#allocation2] sm:$0xff] 0.0
        %372 = vst [vmem:[#allocation2 + $0x8] sm:$0xff] 0.0
        %373 = vst [vmem:[#allocation2 + $0x10] sm:$0xff] 0.0
        %374 = vst [vmem:[#allocation2 + $0x18] sm:$0xff] 0.0
        %375 = vst [vmem:[#allocation2 + $0x20] sm:$0xff] 0.0
        %376 = vst [vmem:[#allocation2 + $0x28] sm:$0xff] 0.0
        %377 = vst [vmem:[#allocation2 + $0x30] sm:$0xff] 0.0
        %378 = vst [vmem:[#allocation2 + $0x38] sm:$0xff] 0.0
        %379 = vst [vmem:[#allocation2 + $0x40] sm:$0xff] 0.0
        %380 = vst [vmem:[#allocation2 + $0x48] sm:$0xff] 0.0
        %381 = vst [vmem:[#allocation2 + $0x50] sm:$0xff] 0.0
        %382 = vst [vmem:[#allocation2 + $0x58] sm:$0xff] 0.0
        %383 = vst [vmem:[#allocation2 + $0x60] sm:$0xff] 0.0
        %384 = vst [vmem:[#allocation2 + $0x68] sm:$0xff] 0.0
        %385 = vst [vmem:[#allocation2 + $0x70] sm:$0xff] 0.0
        %386 = vst [vmem:[#allocation2 + $0x78] sm:$0xff] 0.0
      $region32: #{unet_skip_block_innermost.4} parent=27 // pred_fallthru
        _
      %v387 = vld [vmem:[%s320] sm:$0xf]
      %v388 = vld [vmem:[%s320 + $0x4] sm:$0xf]
      %v389 = vld [vmem:[%s320 + $0x8] sm:$0xf]
      %v390 = vld [vmem:[%s320 + $0xc] sm:$0xf]
      %v391 = vld [vmem:[%s320 + $0x10] sm:$0xf]
      %v392 = vld [vmem:[%s320 + $0x14] sm:$0xf]
      %v393 = vld [vmem:[%s320 + $0x18] sm:$0xf]
      %v394 = vld [vmem:[%s320 + $0x1c] sm:$0xf]
      %v395 = vld [vmem:[%s320 + $0x20] sm:$0xf]
      %v396 = vld [vmem:[%s320 + $0x24] sm:$0xf]
      %v397 = vld [vmem:[%s320 + $0x28] sm:$0xf]
      %v398 = vld [vmem:[%s320 + $0x2c] sm:$0xf]
      %v399 = vld [vmem:[%s320 + $0x30] sm:$0xf]
      %v400 = vld [vmem:[%s320 + $0x34] sm:$0xf]
      %v401 = vld [vmem:[%s320 + $0x38] sm:$0xf]
      %v402 = vld [vmem:[%s320 + $0x3c] sm:$0xf]
      %v403 = vmax.bf16 %v387, 0
      %v404 = vmax.bf16 %v388, 0
      %v405 = vmax.bf16 %v389, 0
      %v406 = vmax.bf16 %v390, 0
      %v407 = vmax.bf16 %v391, 0
      %v408 = vmax.bf16 %v392, 0
      %v409 = vmax.bf16 %v393, 0
      %v410 = vmax.bf16 %v394, 0
      %v411 = vmax.bf16 %v395, 0
      %v412 = vmax.bf16 %v396, 0
      %v413 = vmax.bf16 %v397, 0
      %v414 = vmax.bf16 %v398, 0
      %v415 = vmax.bf16 %v399, 0
      %v416 = vmax.bf16 %v400, 0
      %v417 = vmax.bf16 %v401, 0
      %v418 = vmax.bf16 %v402, 0
      %v419 = vld [vmem:[#allocation2] sm:$0xff]
      %v420 = vld [vmem:[#allocation2 + $0x8] sm:$0xff]
      %v421 = vld [vmem:[#allocation2 + $0x10] sm:$0xff]
      %v422 = vld [vmem:[#allocation2 + $0x18] sm:$0xff]
      %v423 = vld [vmem:[#allocation2 + $0x20] sm:$0xff]
      %v424 = vld [vmem:[#allocation2 + $0x28] sm:$0xff]
      %v425 = vld [vmem:[#allocation2 + $0x30] sm:$0xff]
      %v426 = vld [vmem:[#allocation2 + $0x38] sm:$0xff]
      %v427 = vld [vmem:[#allocation2 + $0x40] sm:$0xff]
      %v428 = vld [vmem:[#allocation2 + $0x48] sm:$0xff]
      %v429 = vld [vmem:[#allocation2 + $0x50] sm:$0xff]
      %v430 = vld [vmem:[#allocation2 + $0x58] sm:$0xff]
      %v431 = vld [vmem:[#allocation2 + $0x60] sm:$0xff]
      %v432 = vld [vmem:[#allocation2 + $0x68] sm:$0xff]
      %v433 = vld [vmem:[#allocation2 + $0x70] sm:$0xff]
      %v434 = vld [vmem:[#allocation2 + $0x78] sm:$0xff]
      %v435 = vld [vmem:[%s333] sm:$0xf]
      %v436 = vld [vmem:[%s333 + $0x4] sm:$0xf]
      %v437 = vld [vmem:[%s333 + $0x8] sm:$0xf]
      %v438 = vld [vmem:[%s333 + $0xc] sm:$0xf]
      %v439 = vld [vmem:[%s333 + $0x10] sm:$0xf]
      %v440 = vld [vmem:[%s333 + $0x14] sm:$0xf]
      %v441 = vld [vmem:[%s333 + $0x18] sm:$0xf]
      %v442 = vld [vmem:[%s333 + $0x1c] sm:$0xf]
      %v443 = vld [vmem:[%s333 + $0x20] sm:$0xf]
      %v444 = vld [vmem:[%s333 + $0x24] sm:$0xf]
      %v445 = vld [vmem:[%s333 + $0x28] sm:$0xf]
      %v446 = vld [vmem:[%s333 + $0x2c] sm:$0xf]
      %v447 = vld [vmem:[%s333 + $0x30] sm:$0xf]
      %v448 = vld [vmem:[%s333 + $0x34] sm:$0xf]
      %v449 = vld [vmem:[%s333 + $0x38] sm:$0xf]
      %v450 = vld [vmem:[%s333 + $0x3c] sm:$0xf]
      %v467 = vunpack.c.l.b16 %v403
      %v468 = vunpack.c.l.b16 %v404
      %v469 = vunpack.c.l.b16 %v405
      %v470 = vunpack.c.l.b16 %v406
      %v471 = vunpack.c.l.b16 %v407
      %v472 = vunpack.c.l.b16 %v408
      %v473 = vunpack.c.l.b16 %v409
      %v474 = vunpack.c.l.b16 %v410
      %v475 = vunpack.c.l.b16 %v411
      %v476 = vunpack.c.l.b16 %v412
      %v477 = vunpack.c.l.b16 %v413
      %v478 = vunpack.c.l.b16 %v414
      %v479 = vunpack.c.l.b16 %v415
      %v480 = vunpack.c.l.b16 %v416
      %v481 = vunpack.c.l.b16 %v417
      %v482 = vunpack.c.l.b16 %v418
      %v483 = vpack.c.b16 %v468, %v467
      %v484 = vpack.c.b16 %v470, %v469
      %v485 = vpack.c.b16 %v472, %v471
      %v486 = vpack.c.b16 %v474, %v473
      %v487 = vpack.c.b16 %v476, %v475
      %v488 = vpack.c.b16 %v478, %v477
      %v489 = vpack.c.b16 %v480, %v479
      %v490 = vpack.c.b16 %v482, %v481
      %v515 = vunpack.c.l.b16 %v435
      %v516 = vunpack.c.l.b16 %v436
      %v517 = vunpack.c.l.b16 %v437
      %v518 = vunpack.c.l.b16 %v438
      %v519 = vunpack.c.l.b16 %v439
      %v520 = vunpack.c.l.b16 %v440
      %v521 = vunpack.c.l.b16 %v441
      %v522 = vunpack.c.l.b16 %v442
      %v523 = vunpack.c.l.b16 %v443
      %v524 = vunpack.c.l.b16 %v444
      %v525 = vunpack.c.l.b16 %v445
      %v526 = vunpack.c.l.b16 %v446
      %v527 = vunpack.c.l.b16 %v447
      %v528 = vunpack.c.l.b16 %v448
      %v529 = vunpack.c.l.b16 %v449
      %v530 = vunpack.c.l.b16 %v450
      %v531 = vpack.c.b16 %v516, %v515
      %v532 = vpack.c.b16 %v518, %v517
      %v533 = vpack.c.b16 %v520, %v519
      %v534 = vpack.c.b16 %v522, %v521
      %v535 = vpack.c.b16 %v524, %v523
      %v536 = vpack.c.b16 %v526, %v525
      %v537 = vpack.c.b16 %v528, %v527
      %v538 = vpack.c.b16 %v530, %v529
      %547 = vmatprep.subr.bf16.mxu0 0
      %548 = vmatpush1.bf16.msra.mxu0 %v538
      %549 = vmatprep.subr.bf16.mxu0 0
      %550 = vmatpush1.bf16.msra.mxu0 %v537
      %551 = vmatprep.subr.bf16.mxu0 0
      %552 = vmatpush1.bf16.msra.mxu0 %v536
      %553 = vmatprep.subr.bf16.mxu0 0
      %554 = vmatpush1.bf16.msra.mxu0 %v535
      %555 = vmatprep.subr.bf16.mxu0 0
      %556 = vmatpush1.bf16.msra.mxu0 %v534
      %557 = vmatprep.subr.bf16.mxu0 0
      %558 = vmatpush1.bf16.msra.mxu0 %v533
      %559 = vmatprep.subr.bf16.mxu0 0
      %560 = vmatpush1.bf16.msra.mxu0 %v532
      %561 = vmatprep.subr.bf16.mxu0 0
      %562 = vmatpush1.bf16.msra.mxu0 %v531
      %563 = vmatprep.subr.bf16.mxu0 0
      %564 = vmatpush2.bf16.msra.mxu0 0
      %565 = vmatprep.subr.bf16.mxu0 0
      %566 = vmatpush2.bf16.msra.mxu0 0
      %567 = vmatprep.subr.bf16.mxu0 0
      %568 = vmatpush2.bf16.msra.mxu0 0
      %569 = vmatprep.subr.bf16.mxu0 0
      %570 = vmatpush2.bf16.msra.mxu0 0
      %571 = vmatprep.subr.bf16.mxu0 0
      %572 = vmatpush2.bf16.msra.mxu0 0
      %573 = vmatprep.subr.bf16.mxu0 0
      %574 = vmatpush2.bf16.msra.mxu0 0
      %575 = vmatprep.subr.bf16.mxu0 0
      %576 = vmatpush2.bf16.msra.mxu0 0
      %577 = vmatprep.subr.bf16.mxu0 0
      %578 = vmatpush2.bf16.msra.mxu0 0
      %579 = vmatprep.mubr.bf16.mxu0 0
      %580 = vmatmul.mubr.bf16.gmra.mxu0 %v483
      %v581 = vpop.f32.mrf.mxu0
      %v582 = vadd.f32 0.0, %v581
      %v583 = vpop.f32.mrf.mxu0
      %v584 = vpop.f32.mrf.mxu0
      %v585 = vadd.f32 0.0, %v584
      %v586 = vpop.f32.mrf.mxu0
      %587 = vmatprep.mubr.bf16.mxu0 0
      %588 = vmatmul.mubr.bf16.gmra.mxu0 %v484
      %v589 = vpop.f32.mrf.mxu0
      %v590 = vadd.f32 0.0, %v589
      %v591 = vpop.f32.mrf.mxu0
      %v592 = vpop.f32.mrf.mxu0
      %v593 = vadd.f32 0.0, %v592
      %v594 = vpop.f32.mrf.mxu0
      %595 = vmatprep.mubr.bf16.mxu0 0
      %596 = vmatmul.mubr.bf16.gmra.mxu0 %v485
      %v597 = vpop.f32.mrf.mxu0
      %v598 = vadd.f32 0.0, %v597
      %v599 = vpop.f32.mrf.mxu0
      %v600 = vpop.f32.mrf.mxu0
      %v601 = vadd.f32 0.0, %v600
      %v602 = vpop.f32.mrf.mxu0
      %603 = vmatprep.mubr.bf16.mxu0 0
      %604 = vmatmul.mubr.bf16.gmra.mxu0 %v486
      %v605 = vpop.f32.mrf.mxu0
      %v606 = vadd.f32 0.0, %v605
      %v607 = vpop.f32.mrf.mxu0
      %v608 = vpop.f32.mrf.mxu0
      %v609 = vadd.f32 0.0, %v608
      %v610 = vpop.f32.mrf.mxu0
      %611 = vmatprep.mubr.bf16.mxu0 0
      %612 = vmatmul.mubr.bf16.gmra.mxu0 %v487
      %v613 = vpop.f32.mrf.mxu0
      %v614 = vadd.f32 0.0, %v613
      %v615 = vpop.f32.mrf.mxu0
      %v616 = vpop.f32.mrf.mxu0
      %v617 = vadd.f32 0.0, %v616
      %v618 = vpop.f32.mrf.mxu0
      %619 = vmatprep.mubr.bf16.mxu0 0
      %620 = vmatmul.mubr.bf16.gmra.mxu0 %v488
      %v621 = vpop.f32.mrf.mxu0
      %v622 = vadd.f32 0.0, %v621
      %v623 = vpop.f32.mrf.mxu0
      %v624 = vpop.f32.mrf.mxu0
      %v625 = vadd.f32 0.0, %v624
      %v626 = vpop.f32.mrf.mxu0
      %627 = vmatprep.mubr.bf16.mxu0 0
      %628 = vmatmul.mubr.bf16.gmra.mxu0 %v489
      %v629 = vpop.f32.mrf.mxu0
      %v630 = vadd.f32 0.0, %v629
      %v631 = vpop.f32.mrf.mxu0
      %v632 = vpop.f32.mrf.mxu0
      %v633 = vadd.f32 0.0, %v632
      %v634 = vpop.f32.mrf.mxu0
      %635 = vmatprep.mubr.bf16.mxu0 0
      %636 = vmatmul.mubr.bf16.gmra.mxu0 %v490
      %v637 = vpop.f32.mrf.mxu0
      %v638 = vadd.f32 0.0, %v637
      %v639 = vpop.f32.mrf.mxu0
      %v640 = vpop.f32.mrf.mxu0
      %v641 = vadd.f32 0.0, %v640
      %v642 = vpop.f32.mrf.mxu0
      %643 = vdwg.mxu0
      %v644 = vadd.f32 %v419, %v582
      %v645 = vadd.f32 %v420, %v585
      %v646 = vadd.f32 %v421, %v590
      %v647 = vadd.f32 %v422, %v593
      %v648 = vadd.f32 %v423, %v598
      %v649 = vadd.f32 %v424, %v601
      %v650 = vadd.f32 %v425, %v606
      %v651 = vadd.f32 %v426, %v609
      %v652 = vadd.f32 %v427, %v614
      %v653 = vadd.f32 %v428, %v617
      %v654 = vadd.f32 %v429, %v622
      %v655 = vadd.f32 %v430, %v625
      %v656 = vadd.f32 %v431, %v630
      %v657 = vadd.f32 %v432, %v633
      %v658 = vadd.f32 %v433, %v638
      %v659 = vadd.f32 %v434, %v641
      %660 = vst [vmem:[#allocation2] sm:$0xff] %v644
      %661 = vst [vmem:[#allocation2 + $0x8] sm:$0xff] %v645
      %662 = vst [vmem:[#allocation2 + $0x10] sm:$0xff] %v646
      %663 = vst [vmem:[#allocation2 + $0x18] sm:$0xff] %v647
      %664 = vst [vmem:[#allocation2 + $0x20] sm:$0xff] %v648
      %665 = vst [vmem:[#allocation2 + $0x28] sm:$0xff] %v649
      %666 = vst [vmem:[#allocation2 + $0x30] sm:$0xff] %v650
      %667 = vst [vmem:[#allocation2 + $0x38] sm:$0xff] %v651
      %668 = vst [vmem:[#allocation2 + $0x40] sm:$0xff] %v652
      %669 = vst [vmem:[#allocation2 + $0x48] sm:$0xff] %v653
      %670 = vst [vmem:[#allocation2 + $0x50] sm:$0xff] %v654
      %671 = vst [vmem:[#allocation2 + $0x58] sm:$0xff] %v655
      %672 = vst [vmem:[#allocation2 + $0x60] sm:$0xff] %v656
      %673 = vst [vmem:[#allocation2 + $0x68] sm:$0xff] %v657
      %674 = vst [vmem:[#allocation2 + $0x70] sm:$0xff] %v658
      %675 = vst [vmem:[#allocation2 + $0x78] sm:$0xff] %v659
      // Predicated region
      $region33: #{unet_skip_block_innermost.4} parent=27 // pred_check
        %p676 = pneg %p367
      $region34: #{unet_skip_block_innermost.4} parent=27 // pred_check_branch
        %678 = sbr.rel (%p676) target = $region36
      $region35: #{unet_skip_block_innermost.4} parent=27 // pred_region
        %v679 = vld [vmem:[#allocation2] sm:$0xff]
        %v680 = vld [vmem:[#allocation2 + $0x8] sm:$0xff]
        %v681 = vld [vmem:[#allocation2 + $0x10] sm:$0xff]
        %v682 = vld [vmem:[#allocation2 + $0x18] sm:$0xff]
        %v683 = vld [vmem:[#allocation2 + $0x20] sm:$0xff]
        %v684 = vld [vmem:[#allocation2 + $0x28] sm:$0xff]
        %v685 = vld [vmem:[#allocation2 + $0x30] sm:$0xff]
        %v686 = vld [vmem:[#allocation2 + $0x38] sm:$0xff]
        %v687 = vld [vmem:[#allocation2 + $0x40] sm:$0xff]
        %v688 = vld [vmem:[#allocation2 + $0x48] sm:$0xff]
        %v689 = vld [vmem:[#allocation2 + $0x50] sm:$0xff]
        %v690 = vld [vmem:[#allocation2 + $0x58] sm:$0xff]
        %v691 = vld [vmem:[#allocation2 + $0x60] sm:$0xff]
        %v692 = vld [vmem:[#allocation2 + $0x68] sm:$0xff]
        %v693 = vld [vmem:[#allocation2 + $0x70] sm:$0xff]
        %v694 = vld [vmem:[#allocation2 + $0x78] sm:$0xff]
        %695 = vst [vmem:[%s346] sm:$0xff] %v679
        %696 = vst [vmem:[%s346 + $0x8] sm:$0xff] %v680
        %697 = vst [vmem:[%s346 + $0x10] sm:$0xff] %v681
        %698 = vst [vmem:[%s346 + $0x18] sm:$0xff] %v682
        %699 = vst [vmem:[%s346 + $0x20] sm:$0xff] %v683
        %700 = vst [vmem:[%s346 + $0x28] sm:$0xff] %v684
        %701 = vst [vmem:[%s346 + $0x30] sm:$0xff] %v685
        %702 = vst [vmem:[%s346 + $0x38] sm:$0xff] %v686
        %703 = vst [vmem:[%s346 + $0x40] sm:$0xff] %v687
        %704 = vst [vmem:[%s346 + $0x48] sm:$0xff] %v688
        %705 = vst [vmem:[%s346 + $0x50] sm:$0xff] %v689
        %706 = vst [vmem:[%s346 + $0x58] sm:$0xff] %v690
        %707 = vst [vmem:[%s346 + $0x60] sm:$0xff] %v691
        %708 = vst [vmem:[%s346 + $0x68] sm:$0xff] %v692
        %709 = vst [vmem:[%s346 + $0x70] sm:$0xff] %v693
        %710 = vst [vmem:[%s346 + $0x78] sm:$0xff] %v694
        %v711 = vadd.f32 %v679, %v680
        %v712 = vadd.f32 %v711, %v681
        %v713 = vadd.f32 %v712, %v682
        %v714 = vadd.f32 %v713, %v683
        %v715 = vadd.f32 %v714, %v684
        %v716 = vadd.f32 %v715, %v685
        %v717 = vadd.f32 %v716, %v686
        %v718 = vadd.f32 %v717, %v687
        %v719 = vadd.f32 %v718, %v688
        %v720 = vadd.f32 %v719, %v689
        %v721 = vadd.f32 %v720, %v690
        %v722 = vadd.f32 %v721, %v691
        %v723 = vadd.f32 %v722, %v692
        %v724 = vadd.f32 %v723, %v693
        %v725 = vadd.f32 %v724, %v694
        %v726 = vrot.slane %v725, 4
        %v727 = vadd.f32 %v725, %v726
        %v728 = vrot.slane %v727, 2
        %v729 = vadd.f32 %v727, %v728
        %v730 = vrot.slane %v729, 1
        %v731 = vadd.f32 %v729, %v730
        %732 = vst [vmem:[%s356] sm:$0x1] %v731
        %v733 = vmul.f32 %v679, %v679
        %v734 = vmul.f32 %v680, %v680
        %v735 = vmul.f32 %v681, %v681
        %v736 = vmul.f32 %v682, %v682
        %v737 = vmul.f32 %v683, %v683
        %v738 = vmul.f32 %v684, %v684
        %v739 = vmul.f32 %v685, %v685
        %v740 = vmul.f32 %v686, %v686
        %v741 = vmul.f32 %v687, %v687
        %v742 = vmul.f32 %v688, %v688
        %v743 = vmul.f32 %v689, %v689
        %v744 = vmul.f32 %v690, %v690
        %v745 = vmul.f32 %v691, %v691
        %v746 = vmul.f32 %v692, %v692
        %v747 = vmul.f32 %v693, %v693
        %v748 = vmul.f32 %v694, %v694
        %v749 = vadd.f32 %v733, %v734
        %v750 = vadd.f32 %v749, %v735
        %v751 = vadd.f32 %v750, %v736
        %v752 = vadd.f32 %v751, %v737
        %v753 = vadd.f32 %v752, %v738
        %v754 = vadd.f32 %v753, %v739
        %v755 = vadd.f32 %v754, %v740
        %v756 = vadd.f32 %v755, %v741
        %v757 = vadd.f32 %v756, %v742
        %v758 = vadd.f32 %v757, %v743
        %v759 = vadd.f32 %v758, %v744
        %v760 = vadd.f32 %v759, %v745
        %v761 = vadd.f32 %v760, %v746
        %v762 = vadd.f32 %v761, %v747
        %v763 = vadd.f32 %v762, %v748
        %v764 = vrot.slane %v763, 4
        %v765 = vadd.f32 %v763, %v764
        %v766 = vrot.slane %v765, 2
        %v767 = vadd.f32 %v765, %v766
        %v768 = vrot.slane %v767, 1
        %v769 = vadd.f32 %v767, %v768
        %770 = vst [vmem:[%s365] sm:$0x1] %v769
      $region36: #{unet_skip_block_innermost.4} parent=27 // pred_fallthru
        _
      %s771 = smul.u32 16, %s23
      %p772 = scmp.lt.s32.totalorder %s22, 3
      %s773 = scalar_select %p772, %s22, 3
      %p774 = scmp.lt.s32.totalorder %s771, 15
      %s775 = scalar_select %p774, %s771, 15
      %p776 = scmp.lt.s32.totalorder %s24, 0
      %s777 = scalar_select %p776, %s24, 0
      %s778 = sadd.s32 %s777, %s775
      %s779 = smul.addr %s773, 16
      %s780 = sadd.s32 %s778, %s779
      %s781 = smul.addr %s780, 8
      %s782 = scalar_lea.vmem %s2, %s781
      %p783 = scmp.lt.s32.totalorder %s22, 3
      %s784 = scalar_select %p783, %s22, 3
      %p785 = scmp.lt.s32.totalorder %s23, 0
      %s786 = scalar_select %p785, %s23, 0
      %p787 = scmp.lt.s32.totalorder %s24, 0
      %s788 = scalar_select %p787, %s24, 0
      %s789 = sadd.s32 %s788, %s786
      %s790 = sadd.s32 %s789, %s784
      %s791 = scalar_lea.vmem %s3, %s790
      %p792 = scmp.lt.s32.totalorder %s22, 3
      %s793 = scalar_select %p792, %s22, 3
      %p794 = scmp.lt.s32.totalorder %s23, 0
      %s795 = scalar_select %p794, %s23, 0
      %p796 = scmp.lt.s32.totalorder %s24, 0
      %s797 = scalar_select %p796, %s24, 0
      %s798 = sadd.s32 %s797, %s795
      %s799 = sadd.s32 %s798, %s793
      %s800 = scalar_lea.vmem %s4, %s799
      // Predicated region
      $region37: #{unet_skip_block_innermost.4} parent=27 // pred_check
        %p801 = pneg %p124
      $region38: #{unet_skip_block_innermost.4} parent=27 // pred_check_branch
        %803 = sbr.rel (%p801) target = $region40
      $region39: #{unet_skip_block_innermost.4} parent=27 // pred_region
        %s804 = smul.u32 16, %s23
      $region40: #{unet_skip_block_innermost.4} parent=27 // pred_fallthru
        _
      // Predicated region
      $region41: #{unet_skip_block_innermost.4} parent=27 // pred_check
        %p805 = pneg %p154
      $region42: #{unet_skip_block_innermost.4} parent=27 // pred_check_branch
        %807 = sbr.rel (%p805) target = $region44
      $region43: #{unet_skip_block_innermost.4} parent=27 // pred_region
        _
      $region44: #{unet_skip_block_innermost.4} parent=27 // pred_fallthru
        _
      // Predicated region
      $region45: #{unet_skip_block_innermost.4} parent=27 // pred_check
        %p808 = pneg %p184
      $region46: #{unet_skip_block_innermost.4} parent=27 // pred_check_branch
        %810 = sbr.rel (%p808) target = $region48
      $region47: #{unet_skip_block_innermost.4} parent=27 // pred_region
        _
      $region48: #{unet_skip_block_innermost.4} parent=27 // pred_fallthru
        _
    $region28: #{unet_skip_block_innermost.4} parent=5 // pred_fallthru
      _
    %p811 = scmp.le.s32.totalorder 2, %s11
    // Predicated region
    $region49: #{unet_skip_block_innermost.4} parent=5 // pred_check
      %p812 = pneg %p811
    $region50: #{unet_skip_block_innermost.4} parent=5 // pred_check_branch
      %814 = sbr.rel (%p812) target = $region52
    $region51: #{unet_skip_block_innermost.4} parent=5 // pred_region
      %s815 = ssub.s32 %s11, 2
      // Predicated region
      $region53: #{unet_skip_block_innermost.4} parent=51 // pred_check
        %p816 = pneg %p130
      $region54: #{unet_skip_block_innermost.4} parent=51 // pred_check_branch
        %818 = sbr.rel (%p816) target = $region56
      $region55: #{unet_skip_block_innermost.4} parent=51 // pred_region
        %s819 = smul.u32 16, %s27
        %p820 = scmp.lt.s32.totalorder %s26, 3
        %s821 = scalar_select %p820, %s26, 3
        %p822 = scmp.lt.s32.totalorder %s819, 15
        %s823 = scalar_select %p822, %s819, 15
        %p824 = scmp.lt.s32.totalorder %s28, 0
        %s825 = scalar_select %p824, %s28, 0
        %s826 = sadd.s32 %s825, %s823
        %s827 = smul.addr %s821, 16
        %s828 = sadd.s32 %s826, %s827
        %s829 = smul.addr %s828, 8
        %s830 = scalar_lea.vmem %s2, %s829
      $region56: #{unet_skip_block_innermost.4} parent=51 // pred_fallthru
        _
      // Predicated region
      $region57: #{unet_skip_block_innermost.4} parent=51 // pred_check
        %p831 = pneg %p160
      $region58: #{unet_skip_block_innermost.4} parent=51 // pred_check_branch
        %833 = sbr.rel (%p831) target = $region60
      $region59: #{unet_skip_block_innermost.4} parent=51 // pred_region
        %p834 = scmp.lt.s32.totalorder %s26, 3
        %s835 = scalar_select %p834, %s26, 3
        %p836 = scmp.lt.s32.totalorder %s27, 0
        %s837 = scalar_select %p836, %s27, 0
        %p838 = scmp.lt.s32.totalorder %s28, 0
        %s839 = scalar_select %p838, %s28, 0
        %s840 = sadd.s32 %s839, %s837
        %s841 = sadd.s32 %s840, %s835
        %s842 = scalar_lea.vmem %s3, %s841
      $region60: #{unet_skip_block_innermost.4} parent=51 // pred_fallthru
        _
      // Predicated region
      $region61: #{unet_skip_block_innermost.4} parent=51 // pred_check
        %p843 = pneg %p190
      $region62: #{unet_skip_block_innermost.4} parent=51 // pred_check_branch
        %845 = sbr.rel (%p843) target = $region64
      $region63: #{unet_skip_block_innermost.4} parent=51 // pred_region
        %p846 = scmp.lt.s32.totalorder %s26, 3
        %s847 = scalar_select %p846, %s26, 3
        %p848 = scmp.lt.s32.totalorder %s27, 0
        %s849 = scalar_select %p848, %s27, 0
        %p850 = scmp.lt.s32.totalorder %s28, 0
        %s851 = scalar_select %p850, %s28, 0
        %s852 = sadd.s32 %s851, %s849
        %s853 = sadd.s32 %s852, %s847
        %s854 = scalar_lea.vmem %s4, %s853
      $region64: #{unet_skip_block_innermost.4} parent=51 // pred_fallthru
        _
    $region52: #{unet_skip_block_innermost.4} parent=5 // pred_fallthru
      _
  $region6: #{unet_skip_block_innermost.4} parent=0 // loop_footer
    %s15 = sadd.s32 1, %s11
  $region7: #{unet_skip_block_innermost.4} parent=0 // loop_footer_branch
    %10 = sbr.rel target = $region3
  $region8: #{unet_skip_block_innermost.4} parent=0 // loop_exit
    _

// kernel: unet_skip_block_innermost.5
$region0: #{unet_skip_block_innermost.5}
  #allocation0 [shape = 'u32[]', space=smem, size = 0x4, offset = 0x4, fixed_abs, tag = 'smem constant byte address 0x4 - core index']
  #allocation1 [shape = 'u32[144,128]{1,0:T(1,128)}', space=vmem, size = 0x12000, scoped, tag = 'internal scratch']
  %s0 = inlined_call_operand.vmem [shape: f32[512,128], index: 0, kind: input, shape index: {}]
  %s1 = inlined_call_operand.vmem [shape: f32[1,128], index: 1, kind: input, shape index: {}]
  %s2 = inlined_call_operand.vmem [shape: f32[1,128], index: 2, kind: input, shape index: {}]
  %s3 = inlined_call_operand.vmem [shape: f32[512,128], index: 3, kind: output, shape index: {}]
  %s4 = sld [smem:[#allocation0]]
  $region22: #{unet_skip_block_innermost.5} parent=0
    _
  %s6 = ssub.s32 1, %s4
  %s7 = scalar_select 0, %s6, %s4
  // Predicated region
  $region2: #{unet_skip_block_innermost.5} parent=0 // pred_check
    _
  $region3: #{unet_skip_block_innermost.5} parent=0 // pred_check_branch
    %9 = sbr.rel (0) target = $region5
  $region4: #{unet_skip_block_innermost.5} parent=0 // pred_region
    _
  $region5: #{unet_skip_block_innermost.5} parent=0 // pred_fallthru
    _
  // Predicated region
  $region6: #{unet_skip_block_innermost.5} parent=0 // pred_check
    _
  $region7: #{unet_skip_block_innermost.5} parent=0 // pred_check_branch
    %11 = sbr.rel (0) target = $region9
  $region8: #{unet_skip_block_innermost.5} parent=0 // pred_region
    _
  $region9: #{unet_skip_block_innermost.5} parent=0 // pred_fallthru
    _
  // Predicated region
  $region10: #{unet_skip_block_innermost.5} parent=0 // pred_check
    _
  $region11: #{unet_skip_block_innermost.5} parent=0 // pred_check_branch
    %13 = sbr.rel (0) target = $region13
  $region12: #{unet_skip_block_innermost.5} parent=0 // pred_region
    _
  $region13: #{unet_skip_block_innermost.5} parent=0 // pred_fallthru
    _
  %v14 = vld [vmem:[%s0] sm:$0xff]
  %v15 = vld [vmem:[%s0 + $0x8] sm:$0xff]
  %v16 = vld [vmem:[%s0 + $0x10] sm:$0xff]
  %v17 = vld [vmem:[%s0 + $0x18] sm:$0xff]
  %v18 = vld [vmem:[%s0 + $0x20] sm:$0xff]
  %v19 = vld [vmem:[%s0 + $0x28] sm:$0xff]
  %v20 = vld [vmem:[%s0 + $0x30] sm:$0xff]
  %v21 = vld [vmem:[%s0 + $0x38] sm:$0xff]
  %v22 = vld [vmem:[%s0 + $0x40] sm:$0xff]
  %v23 = vld [vmem:[%s0 + $0x48] sm:$0xff]
  %v24 = vld [vmem:[%s0 + $0x50] sm:$0xff]
  %v25 = vld [vmem:[%s0 + $0x58] sm:$0xff]
  %v26 = vld [vmem:[%s0 + $0x60] sm:$0xff]
  %v27 = vld [vmem:[%s0 + $0x68] sm:$0xff]
  %v28 = vld [vmem:[%s0 + $0x70] sm:$0xff]
  %v29 = vld [vmem:[%s0 + $0x78] sm:$0xff]
  %v30 = vld [vmem:[%s0 + $0x80] sm:$0xff]
  %v31 = vld [vmem:[%s0 + $0x88] sm:$0xff]
  %v32 = vld [vmem:[%s0 + $0x90] sm:$0xff]
  %v33 = vld [vmem:[%s0 + $0x98] sm:$0xff]
  %v34 = vld [vmem:[%s0 + $0xa0] sm:$0xff]
  %v35 = vld [vmem:[%s0 + $0xa8] sm:$0xff]
  %v36 = vld [vmem:[%s0 + $0xb0] sm:$0xff]
  %v37 = vld [vmem:[%s0 + $0xb8] sm:$0xff]
  %v38 = vld [vmem:[%s0 + $0xc0] sm:$0xff]
  %v39 = vld [vmem:[%s0 + $0xc8] sm:$0xff]
  %v40 = vld [vmem:[%s0 + $0xd0] sm:$0xff]
  %v41 = vld [vmem:[%s0 + $0xd8] sm:$0xff]
  %v42 = vld [vmem:[%s0 + $0xe0] sm:$0xff]
  %v43 = vld [vmem:[%s0 + $0xe8] sm:$0xff]
  %v44 = vld [vmem:[%s0 + $0xf0] sm:$0xff]
  %v45 = vld [vmem:[%s0 + $0xf8] sm:$0xff]
  %v46 = vld [vmem:[%s0 + $0x100] sm:$0xff]
  %v47 = vld [vmem:[%s0 + $0x108] sm:$0xff]
  %v48 = vld [vmem:[%s0 + $0x110] sm:$0xff]
  %v49 = vld [vmem:[%s0 + $0x118] sm:$0xff]
  %v50 = vld [vmem:[%s0 + $0x120] sm:$0xff]
  %v51 = vld [vmem:[%s0 + $0x128] sm:$0xff]
  %v52 = vld [vmem:[%s0 + $0x130] sm:$0xff]
  %v53 = vld [vmem:[%s0 + $0x138] sm:$0xff]
  %v54 = vld [vmem:[%s0 + $0x140] sm:$0xff]
  %v55 = vld [vmem:[%s0 + $0x148] sm:$0xff]
  %v56 = vld [vmem:[%s0 + $0x150] sm:$0xff]
  %v57 = vld [vmem:[%s0 + $0x158] sm:$0xff]
  %v58 = vld [vmem:[%s0 + $0x160] sm:$0xff]
  %v59 = vld [vmem:[%s0 + $0x168] sm:$0xff]
  %v60 = vld [vmem:[%s0 + $0x170] sm:$0xff]
  %v61 = vld [vmem:[%s0 + $0x178] sm:$0xff]
  %v62 = vld [vmem:[%s0 + $0x180] sm:$0xff]
  %v63 = vld [vmem:[%s0 + $0x188] sm:$0xff]
  %v64 = vld [vmem:[%s0 + $0x190] sm:$0xff]
  %v65 = vld [vmem:[%s0 + $0x198] sm:$0xff]
  %v66 = vld [vmem:[%s0 + $0x1a0] sm:$0xff]
  %v67 = vld [vmem:[%s0 + $0x1a8] sm:$0xff]
  %v68 = vld [vmem:[%s0 + $0x1b0] sm:$0xff]
  %v69 = vld [vmem:[%s0 + $0x1b8] sm:$0xff]
  %v70 = vld [vmem:[%s0 + $0x1c0] sm:$0xff]
  %v71 = vld [vmem:[%s0 + $0x1c8] sm:$0xff]
  %v72 = vld [vmem:[%s0 + $0x1d0] sm:$0xff]
  %v73 = vld [vmem:[%s0 + $0x1d8] sm:$0xff]
  %v74 = vld [vmem:[%s0 + $0x1e0] sm:$0xff]
  %v75 = vld [vmem:[%s0 + $0x1e8] sm:$0xff]
  %v76 = vld [vmem:[%s0 + $0x1f0] sm:$0xff]
  %v77 = vld [vmem:[%s0 + $0x1f8] sm:$0xff]
  %v78 = vld [vmem:[%s1] sm:$0x1]
  %v80 = vlaneseq
  %v81 = vshrl.u32 %v80, 7
  %v82 = vsub.s32 0, %v81
  %v83 = vrot.slane %v78, %v82
  %v85 = vmul.f32 %v14, %v83
  %v86 = vmul.f32 %v15, %v83
  %v87 = vmul.f32 %v16, %v83
  %v88 = vmul.f32 %v17, %v83
  %v89 = vmul.f32 %v18, %v83
  %v90 = vmul.f32 %v19, %v83
  %v91 = vmul.f32 %v20, %v83
  %v92 = vmul.f32 %v21, %v83
  %v93 = vmul.f32 %v22, %v83
  %v94 = vmul.f32 %v23, %v83
  %v95 = vmul.f32 %v24, %v83
  %v96 = vmul.f32 %v25, %v83
  %v97 = vmul.f32 %v26, %v83
  %v98 = vmul.f32 %v27, %v83
  %v99 = vmul.f32 %v28, %v83
  %v100 = vmul.f32 %v29, %v83
  %v101 = vmul.f32 %v30, %v83
  %v102 = vmul.f32 %v31, %v83
  %v103 = vmul.f32 %v32, %v83
  %v104 = vmul.f32 %v33, %v83
  %v105 = vmul.f32 %v34, %v83
  %v106 = vmul.f32 %v35, %v83
  %v107 = vmul.f32 %v36, %v83
  %v108 = vmul.f32 %v37, %v83
  %v109 = vmul.f32 %v38, %v83
  %v110 = vmul.f32 %v39, %v83
  %v111 = vmul.f32 %v40, %v83
  %v112 = vmul.f32 %v41, %v83
  %v113 = vmul.f32 %v42, %v83
  %v114 = vmul.f32 %v43, %v83
  %v115 = vmul.f32 %v44, %v83
  %v116 = vmul.f32 %v45, %v83
  %v117 = vmul.f32 %v46, %v83
  %v118 = vmul.f32 %v47, %v83
  %v119 = vmul.f32 %v48, %v83
  %v120 = vmul.f32 %v49, %v83
  %v121 = vmul.f32 %v50, %v83
  %v122 = vmul.f32 %v51, %v83
  %v123 = vmul.f32 %v52, %v83
  %v124 = vmul.f32 %v53, %v83
  %v125 = vmul.f32 %v54, %v83
  %v126 = vmul.f32 %v55, %v83
  %v127 = vmul.f32 %v56, %v83
  %v128 = vmul.f32 %v57, %v83
  %v129 = vmul.f32 %v58, %v83
  %v130 = vmul.f32 %v59, %v83
  %v131 = vmul.f32 %v60, %v83
  %v132 = vmul.f32 %v61, %v83
  %v133 = vmul.f32 %v62, %v83
  %v134 = vmul.f32 %v63, %v83
  %v135 = vmul.f32 %v64, %v83
  %v136 = vmul.f32 %v65, %v83
  %v137 = vmul.f32 %v66, %v83
  %v138 = vmul.f32 %v67, %v83
  %v139 = vmul.f32 %v68, %v83
  %v140 = vmul.f32 %v69, %v83
  %v141 = vmul.f32 %v70, %v83
  %v142 = vmul.f32 %v71, %v83
  %v143 = vmul.f32 %v72, %v83
  %v144 = vmul.f32 %v73, %v83
  %v145 = vmul.f32 %v74, %v83
  %v146 = vmul.f32 %v75, %v83
  %v147 = vmul.f32 %v76, %v83
  %v148 = vmul.f32 %v77, %v83
  %v149 = vld [vmem:[%s2] sm:$0x1]
  %v151 = vlaneseq
  %v152 = vshrl.u32 %v151, 7
  %v153 = vsub.s32 0, %v152
  %v154 = vrot.slane %v149, %v153
  %v156 = vadd.f32 %v85, %v154
  %v157 = vadd.f32 %v86, %v154
  %v158 = vadd.f32 %v87, %v154
  %v159 = vadd.f32 %v88, %v154
  %v160 = vadd.f32 %v89, %v154
  %v161 = vadd.f32 %v90, %v154
  %v162 = vadd.f32 %v91, %v154
  %v163 = vadd.f32 %v92, %v154
  %v164 = vadd.f32 %v93, %v154
  %v165 = vadd.f32 %v94, %v154
  %v166 = vadd.f32 %v95, %v154
  %v167 = vadd.f32 %v96, %v154
  %v168 = vadd.f32 %v97, %v154
  %v169 = vadd.f32 %v98, %v154
  %v170 = vadd.f32 %v99, %v154
  %v171 = vadd.f32 %v100, %v154
  %v172 = vadd.f32 %v101, %v154
  %v173 = vadd.f32 %v102, %v154
  %v174 = vadd.f32 %v103, %v154
  %v175 = vadd.f32 %v104, %v154
  %v176 = vadd.f32 %v105, %v154
  %v177 = vadd.f32 %v106, %v154
  %v178 = vadd.f32 %v107, %v154
  %v179 = vadd.f32 %v108, %v154
  %v180 = vadd.f32 %v109, %v154
  %v181 = vadd.f32 %v110, %v154
  %v182 = vadd.f32 %v111, %v154
  %v183 = vadd.f32 %v112, %v154
  %v184 = vadd.f32 %v113, %v154
  %v185 = vadd.f32 %v114, %v154
  %v186 = vadd.f32 %v115, %v154
  %v187 = vadd.f32 %v116, %v154
  %v188 = vadd.f32 %v117, %v154
  %v189 = vadd.f32 %v118, %v154
  %v190 = vadd.f32 %v119, %v154
  %v191 = vadd.f32 %v120, %v154
  %v192 = vadd.f32 %v121, %v154
  %v193 = vadd.f32 %v122, %v154
  %v194 = vadd.f32 %v123, %v154
  %v195 = vadd.f32 %v124, %v154
  %v196 = vadd.f32 %v125, %v154
  %v197 = vadd.f32 %v126, %v154
  %v198 = vadd.f32 %v127, %v154
  %v199 = vadd.f32 %v128, %v154
  %v200 = vadd.f32 %v129, %v154
  %v201 = vadd.f32 %v130, %v154
  %v202 = vadd.f32 %v131, %v154
  %v203 = vadd.f32 %v132, %v154
  %v204 = vadd.f32 %v133, %v154
  %v205 = vadd.f32 %v134, %v154
  %v206 = vadd.f32 %v135, %v154
  %v207 = vadd.f32 %v136, %v154
  %v208 = vadd.f32 %v137, %v154
  %v209 = vadd.f32 %v138, %v154
  %v210 = vadd.f32 %v139, %v154
  %v211 = vadd.f32 %v140, %v154
  %v212 = vadd.f32 %v141, %v154
  %v213 = vadd.f32 %v142, %v154
  %v214 = vadd.f32 %v143, %v154
  %v215 = vadd.f32 %v144, %v154
  %v216 = vadd.f32 %v145, %v154
  %v217 = vadd.f32 %v146, %v154
  %v218 = vadd.f32 %v147, %v154
  %v219 = vadd.f32 %v148, %v154
  %220 = vst [vmem:[%s3] sm:$0xff] %v156
  %221 = vst [vmem:[%s3 + $0x8] sm:$0xff] %v157
  %222 = vst [vmem:[%s3 + $0x10] sm:$0xff] %v158
  %223 = vst [vmem:[%s3 + $0x18] sm:$0xff] %v159
  %224 = vst [vmem:[%s3 + $0x20] sm:$0xff] %v160
  %225 = vst [vmem:[%s3 + $0x28] sm:$0xff] %v161
  %226 = vst [vmem:[%s3 + $0x30] sm:$0xff] %v162
  %227 = vst [vmem:[%s3 + $0x38] sm:$0xff] %v163
  %228 = vst [vmem:[%s3 + $0x40] sm:$0xff] %v164
  %229 = vst [vmem:[%s3 + $0x48] sm:$0xff] %v165
  %230 = vst [vmem:[%s3 + $0x50] sm:$0xff] %v166
  %231 = vst [vmem:[%s3 + $0x58] sm:$0xff] %v167
  %232 = vst [vmem:[%s3 + $0x60] sm:$0xff] %v168
  %233 = vst [vmem:[%s3 + $0x68] sm:$0xff] %v169
  %234 = vst [vmem:[%s3 + $0x70] sm:$0xff] %v170
  %235 = vst [vmem:[%s3 + $0x78] sm:$0xff] %v171
  %236 = vst [vmem:[%s3 + $0x80] sm:$0xff] %v172
  %237 = vst [vmem:[%s3 + $0x88] sm:$0xff] %v173
  %238 = vst [vmem:[%s3 + $0x90] sm:$0xff] %v174
  %239 = vst [vmem:[%s3 + $0x98] sm:$0xff] %v175
  %240 = vst [vmem:[%s3 + $0xa0] sm:$0xff] %v176
  %241 = vst [vmem:[%s3 + $0xa8] sm:$0xff] %v177
  %242 = vst [vmem:[%s3 + $0xb0] sm:$0xff] %v178
  %243 = vst [vmem:[%s3 + $0xb8] sm:$0xff] %v179
  %244 = vst [vmem:[%s3 + $0xc0] sm:$0xff] %v180
  %245 = vst [vmem:[%s3 + $0xc8] sm:$0xff] %v181
  %246 = vst [vmem:[%s3 + $0xd0] sm:$0xff] %v182
  %247 = vst [vmem:[%s3 + $0xd8] sm:$0xff] %v183
  %248 = vst [vmem:[%s3 + $0xe0] sm:$0xff] %v184
  %249 = vst [vmem:[%s3 + $0xe8] sm:$0xff] %v185
  %250 = vst [vmem:[%s3 + $0xf0] sm:$0xff] %v186
  %251 = vst [vmem:[%s3 + $0xf8] sm:$0xff] %v187
  %252 = vst [vmem:[%s3 + $0x100] sm:$0xff] %v188
  %253 = vst [vmem:[%s3 + $0x108] sm:$0xff] %v189
  %254 = vst [vmem:[%s3 + $0x110] sm:$0xff] %v190
  %255 = vst [vmem:[%s3 + $0x118] sm:$0xff] %v191
  %256 = vst [vmem:[%s3 + $0x120] sm:$0xff] %v192
  %257 = vst [vmem:[%s3 + $0x128] sm:$0xff] %v193
  %258 = vst [vmem:[%s3 + $0x130] sm:$0xff] %v194
  %259 = vst [vmem:[%s3 + $0x138] sm:$0xff] %v195
  %260 = vst [vmem:[%s3 + $0x140] sm:$0xff] %v196
  %261 = vst [vmem:[%s3 + $0x148] sm:$0xff] %v197
  %262 = vst [vmem:[%s3 + $0x150] sm:$0xff] %v198
  %263 = vst [vmem:[%s3 + $0x158] sm:$0xff] %v199
  %264 = vst [vmem:[%s3 + $0x160] sm:$0xff] %v200
  %265 = vst [vmem:[%s3 + $0x168] sm:$0xff] %v201
  %266 = vst [vmem:[%s3 + $0x170] sm:$0xff] %v202
  %267 = vst [vmem:[%s3 + $0x178] sm:$0xff] %v203
  %268 = vst [vmem:[%s3 + $0x180] sm:$0xff] %v204
  %269 = vst [vmem:[%s3 + $0x188] sm:$0xff] %v205
  %270 = vst [vmem:[%s3 + $0x190] sm:$0xff] %v206
  %271 = vst [vmem:[%s3 + $0x198] sm:$0xff] %v207
  %272 = vst [vmem:[%s3 + $0x1a0] sm:$0xff] %v208
  %273 = vst [vmem:[%s3 + $0x1a8] sm:$0xff] %v209
  %274 = vst [vmem:[%s3 + $0x1b0] sm:$0xff] %v210
  %275 = vst [vmem:[%s3 + $0x1b8] sm:$0xff] %v211
  %276 = vst [vmem:[%s3 + $0x1c0] sm:$0xff] %v212
  %277 = vst [vmem:[%s3 + $0x1c8] sm:$0xff] %v213
  %278 = vst [vmem:[%s3 + $0x1d0] sm:$0xff] %v214
  %279 = vst [vmem:[%s3 + $0x1d8] sm:$0xff] %v215
  %280 = vst [vmem:[%s3 + $0x1e0] sm:$0xff] %v216
  %281 = vst [vmem:[%s3 + $0x1e8] sm:$0xff] %v217
  %282 = vst [vmem:[%s3 + $0x1f0] sm:$0xff] %v218
  %283 = vst [vmem:[%s3 + $0x1f8] sm:$0xff] %v219
  // Predicated region
  $region14: #{unet_skip_block_innermost.5} parent=0 // pred_check
    _
  $region15: #{unet_skip_block_innermost.5} parent=0 // pred_check_branch
    %285 = sbr.rel (0) target = $region17
  $region16: #{unet_skip_block_innermost.5} parent=0 // pred_region
    _
  $region17: #{unet_skip_block_innermost.5} parent=0 // pred_fallthru
    _
  // Predicated region
  $region18: #{unet_skip_block_innermost.5} parent=0 // pred_check
    _
  $region19: #{unet_skip_block_innermost.5} parent=0 // pred_check_branch
    %287 = sbr.rel (0) target = $region21
  $region20: #{unet_skip_block_innermost.5} parent=0 // pred_region
    _
  $region21: #{unet_skip_block_innermost.5} parent=0 // pred_fallthru
    _

</llo_original>
